<compile_context>
chip_gen: v6e
topology: v6e:2x2x1
jax: 0.10.0
libtpu: 0.0.40
codegen_flags: <defaults>
</compile_context>

<pallas_src>
import math
import functools

import jax
import jax.numpy as jnp
from jax import lax
from jax.experimental import pallas as pl
from jax.experimental.pallas import tpu as pltpu


_VMEM_LIMIT_BYTES = 64 * 1024 * 1024    # explicit scoped-VMEM limit
_FUSED_PATH_BUDGET = 20 * 1024 * 1024   # conservative budget for the 1-shot path


# ---------------------------------------------------------------------------
# helpers
# ---------------------------------------------------------------------------
def _round_up(x, m):
    return ((x + m - 1) // m) * m


def _pad2d(a, shape):
    """Zero-pad a 2-D array up to `shape`."""
    return jnp.pad(a, [(0, s - d) for d, s in zip(a.shape, shape)])


def _gcn_relu(adj_bf16, h_bf16, w_bf16, b_f32):
    """relu(adj @ (h @ W) + b) with bf16 MXU feeds, f32 accumulation/epilogue."""
    support = jnp.dot(h_bf16, w_bf16, preferred_element_type=jnp.float32)   # MXU
    agg = jnp.dot(adj_bf16, support.astype(jnp.bfloat16),                   # MXU
                  preferred_element_type=jnp.float32)
    return jnp.maximum(agg + b_f32, 0.0)                                    # VPU, f32


# ---------------------------------------------------------------------------
# Kernel 1 (small problems): whole forward in a single no-grid invocation.
# ---------------------------------------------------------------------------
def _teacher_lr_fused_kernel(x_ref, adj_ref, w1_ref, b1_ref, w2_ref, b2_ref,
                             w3_ref, b3_ref, out_ref):
    adj = adj_ref[...]                                             # bf16, hoisted
    h = _gcn_relu(adj, x_ref[...], w1_ref[...], b1_ref[...])       # gc1 (f32 out)
    h = _gcn_relu(adj, h.astype(jnp.bfloat16), w2_ref[...], b2_ref[...])  # gc2
    out_ref[0] = h

    t_total = out_ref.shape[0]
    w3 = w3_ref[...]
    b3 = b3_ref[...]

    if t_total <= 8:
        # Small static T: fully unrolled recurrence.
        for t in range(1, t_total):
            h = _gcn_relu(adj, h.astype(jnp.bfloat16), w3, b3)
            out_ref[t] = h
    else:
        def body(t, h_carry):
            h_new = _gcn_relu(adj, h_carry.astype(jnp.bfloat16), w3, b3)
            out_ref[t] = h_new
            return h_new
        lax.fori_loop(1, t_total, body, h)


# ---------------------------------------------------------------------------
# Kernel 2a (large problems): "stem" = gc1 + gc2, single invocation.
#   x, W1, W2 are only referenced here, so they never occupy VMEM during the
#   timepoint recurrence.
# ---------------------------------------------------------------------------
def _teacher_lr_stem_kernel(x_ref, adj_ref, w1_ref, b1_ref, w2_ref, b2_ref,
                            h0_ref):
    adj = adj_ref[...]
    h = _gcn_relu(adj, x_ref[...], w1_ref[...], b1_ref[...])
    h0_ref[...] = _gcn_relu(adj, h.astype(jnp.bfloat16), w2_ref[...], b2_ref[...])


# ---------------------------------------------------------------------------
# Kernel 2b (large problems): recurrent gc3, one grid step per timepoint.
#   h lives in an f32 VMEM scratch carried across grid steps ("arbitrary" axis).
# ---------------------------------------------------------------------------
def _teacher_lr_recurrent_kernel(h0_ref, adj_ref, w3_ref, b3_ref, out_ref, h_ref):
    t = pl.program_id(0)

    @pl.when(t == 0)
    def _():
        h0 = h0_ref[...]
        h_ref[...] = h0
        out_ref[...] = h0

    @pl.when(t > 0)
    def _():
        h_new = _gcn_relu(adj_ref[...], h_ref[...].astype(jnp.bfloat16),
                          w3_ref[...], b3_ref[...])
        h_ref[...] = h_new      # carried state
        out_ref[...] = h_new    # store once from vregs (no h re-load)


# ---------------------------------------------------------------------------
# pallas_call wrappers
# ---------------------------------------------------------------------------
@functools.partial(jax.jit, static_argnames=("timepoints",))
def _teacher_lr_call_fused(x_p, adj_p, w1, b1, w2, b2, w3, b3, *, timepoints):
    n_pad = adj_p.shape[0]
    f3_pad = w3.shape[1]
    return pl.pallas_call(
        _teacher_lr_fused_kernel,
        out_shape=jax.ShapeDtypeStruct((timepoints, n_pad, f3_pad), jnp.float32),
        compiler_params=pltpu.CompilerParams(vmem_limit_bytes=_VMEM_LIMIT_BYTES),
    )(x_p, adj_p, w1, b1, w2, b2, w3, b3)


@functools.partial(jax.jit, static_argnames=("timepoints",))
def _teacher_lr_call_grid(x_p, adj_p, w1, b1, w2, b2, w3, b3, *, timepoints):
    n_pad = adj_p.shape[0]
    f3_pad = w3.shape[1]

    # Stage 1: stem (gc1 + gc2).
    h0 = pl.pallas_call(
        _teacher_lr_stem_kernel,
        out_shape=jax.ShapeDtypeStruct((n_pad, f3_pad), jnp.float32),
        compiler_params=pltpu.CompilerParams(vmem_limit_bytes=_VMEM_LIMIT_BYTES),
    )(x_p, adj_p, w1, b1, w2, b2)

    # Stage 2: gc3 recurrence. Constant index maps keep adj/W3/b3/h0 VMEM
    # resident across all timepoints (DMA'd once).
    const2d = lambda t: (0, 0)
    return pl.pallas_call(
        _teacher_lr_recurrent_kernel,
        out_shape=jax.ShapeDtypeStruct((timepoints, n_pad, f3_pad), jnp.float32),
        grid=(timepoints,),
        in_specs=[
            pl.BlockSpec((n_pad, f3_pad), const2d),    # h0
            pl.BlockSpec((n_pad, n_pad), const2d),     # adj (bf16)
            pl.BlockSpec((f3_pad, f3_pad), const2d),   # W3 (bf16)
            pl.BlockSpec((1, f3_pad), const2d),        # b3 (f32)
        ],
        out_specs=pl.BlockSpec((None, n_pad, f3_pad), lambda t: (t, 0, 0)),
        scratch_shapes=[pltpu.VMEM((n_pad, f3_pad), jnp.float32)],
        compiler_params=pltpu.CompilerParams(
            dimension_semantics=("arbitrary",),  # h carried across timepoints
            vmem_limit_bytes=_VMEM_LIMIT_BYTES,
        ),
    )(h0, adj_p, w3, b3)


# ---------------------------------------------------------------------------
# Teacher_LR module (parameters held as plain JAX arrays)
# ---------------------------------------------------------------------------
def _init_gcn_params(key, in_features, out_features):
    """Mirror GCN.reset_parameters: uniform(-stdv, stdv), stdv = 1/sqrt(out)."""
    stdv = 1.0 / math.sqrt(out_features)
    kw, kb = jax.random.split(key)
    w = jax.random.uniform(kw, (in_features, out_features), jnp.float32,
                           minval=-stdv, maxval=stdv)
    b = jax.random.uniform(kb, (out_features,), jnp.float32,
                           minval=-stdv, maxval=stdv)
    return w, b


def make_teacher_lr_params(key, nhid1, nhid2, nhid3):
    k1, k2, k3 = jax.random.split(key, 3)
    return {
        "gc1": _init_gcn_params(k1, nhid1, nhid2),
        "gc2": _init_gcn_params(k2, nhid2, nhid3),
        "gc3": _init_gcn_params(k3, nhid3, nhid3),
    }


def teacher_lr_forward(params, x, adj, timepoints, dropout=0.0, force_grid=False):
    """Forward pass of Teacher_LR.  Returns a list of `timepoints` (N, nhid3) arrays."""
    del dropout  # eval-mode identity
    w1, b1 = params["gc1"]
    w2, b2 = params["gc2"]
    w3, b3 = params["gc3"]

    n, f_in = x.shape
    nhid2 = w1.shape[1]
    nhid3 = w3.shape[1]

    # Pad N and every feature dim to multiples of 128 (lane-dense, clean MXU tiles).
    n_pad = _round_up(n, 128)
    f1_pad = _round_up(f_in, 128)
    f2_pad = _round_up(nhid2, 128)
    f3_pad = _round_up(nhid3, 128)

    bf16 = jnp.bfloat16
    x_p = _pad2d(x, (n_pad, f1_pad)).astype(bf16)
    adj_p = _pad2d(adj, (n_pad, n_pad)).astype(bf16)
    w1_p = _pad2d(w1, (f1_pad, f2_pad)).astype(bf16)
    w2_p = _pad2d(w2, (f2_pad, f3_pad)).astype(bf16)
    w3_p = _pad2d(w3, (f3_pad, f3_pad)).astype(bf16)
    b1_p = _pad2d(b1.reshape(1, -1), (1, f2_pad)).astype(jnp.float32)
    b2_p = _pad2d(b2.reshape(1, -1), (1, f3_pad)).astype(jnp.float32)
    b3_p = _pad2d(b3.reshape(1, -1), (1, f3_pad)).astype(jnp.float32)

    # NOTE: padded rows of h become relu(b) (not zero) after the first bias-add.
    # That never contaminates the cropped [:n, :nhid3] slice because adj's
    # padded columns are zero -- never rely on the padded region being zero.

    fused_bytes = (
        2 * (n_pad * f1_pad + n_pad * n_pad + f1_pad * f2_pad
             + f2_pad * f3_pad + f3_pad * f3_pad)
        + 4 * (f2_pad + 2 * f3_pad)
        + 4 * timepoints * n_pad * f3_pad)

    if (not force_grid) and fused_bytes <= _FUSED_PATH_BUDGET:
        out = _teacher_lr_call_fused(x_p, adj_p, w1_p, b1_p, w2_p, b2_p,
                                     w3_p, b3_p, timepoints=timepoints)
    else:
        out = _teacher_lr_call_grid(x_p, adj_p, w1_p, b1_p, w2_p, b2_p,
                                    w3_p, b3_p, timepoints=timepoints)

    out = out[:, :n, :nhid3]
    return [out[t] for t in range(timepoints)]


# ---------------------------------------------------------------------------
# Pure-JAX references (for correctness check)
# ---------------------------------------------------------------------------
def _teacher_lr_ref_f32(params, x, adj, timepoints):
    def gcn_relu(h, w, b):
        return jnp.maximum(adj @ (h @ w) + b, 0.0)

    w1, b1 = params["gc1"]
    w2, b2 = params["gc2"]
    w3, b3 = params["gc3"]
    h = gcn_relu(gcn_relu(x, w1, b1), w2, b2)
    preds = [h]
    for _ in range(1, timepoints):
        h = gcn_relu(h, w3, b3)
        preds.append(h)
    return preds


def _teacher_lr_ref_bf16(params, x, adj, timepoints):
    """Same math as the kernel: bf16 matmul inputs, f32 accumulation/epilogue."""
    adj_b = adj.astype(jnp.bfloat16)

    def gcn_relu(h, w, b):
        s = jnp.dot(h.astype(jnp.bfloat16), w.astype(jnp.bfloat16),
                    preferred_element_type=jnp.float32)
        a = jnp.dot(adj_b, s.astype(jnp.bfloat16),
                    preferred_element_type=jnp.float32)
        return jnp.maximum(a + b, 0.0)

    w1, b1 = params["gc1"]
    w2, b2 = params["gc2"]
    w3, b3 = params["gc3"]
    h = gcn_relu(gcn_relu(x, w1, b1), w2, b2)
    preds = [h]
    for _ in range(1, timepoints):
        h = gcn_relu(h, w3, b3)
        preds.append(h)
    return preds


# ---------------------------------------------------------------------------
# Demo / smoke test
# ---------------------------------------------------------------------------
if __name__ == "__main__":
    # Small shapes consistent with the module's forward:
    #   x:   (N, nhid1) node features
    #   adj: (N, N)     adjacency matrix
    N = 16
    nhid1, nhid2, nhid3 = 32, 32, 32
    timepoints = 3
    dropout = 0.5  # ignored in eval mode

    key = jax.random.PRNGKey(0)
    kx, kadj, kparams = jax.random.split(key, 3)

    x = jax.random.normal(kx, (N, nhid1), jnp.float32)
    # symmetric, row-normalized dense adjacency
    a = jax.random.uniform(kadj, (N, N), jnp.float32)
    adj = (a + a.T) * 0.5
    adj = adj / jnp.sum(adj, axis=1, keepdims=True)

    params = make_teacher_lr_params(kparams, nhid1, nhid2, nhid3)

    refs_bf16 = _teacher_lr_ref_bf16(params, x, adj, timepoints)
    refs_f32 = _teacher_lr_ref_f32(params, x, adj, timepoints)

    # Exercise both the fused single-shot path and the stem+grid path.
    for force_grid in (False, True):
        preds = teacher_lr_forward(params, x, adj, timepoints, dropout,
                                   force_grid=force_grid)
        preds = [jax.block_until_ready(p) for p in preds]
        assert len(preds) == timepoints
        for p, rb, rf in zip(preds, refs_bf16, refs_f32):
            assert p.shape == (N, nhid3)
            assert p.dtype == jnp.float32
            assert bool(jnp.all(jnp.isfinite(p)))
            assert bool(jnp.all(p >= 0.0))  # ReLU output
            # bf16-MXU numerics: tight vs bf16-matmul reference, loose vs f32.
            assert bool(jnp.allclose(p, rb, rtol=1e-3, atol=1e-3))
            assert bool(jnp.allclose(p, rf, rtol=5e-2, atol=5e-2))

    print("KERNEL_OK")
</pallas_src>

<mosaic_0001>
module attributes {stable_mosaic.version = 11 : i64} {
  func.func @_teacher_lr_fused_kernel(%arg0: memref<128x128xbf16, #tpu.memory_space<vmem>>, %arg1: memref<128x128xbf16, #tpu.memory_space<vmem>>, %arg2: memref<128x128xbf16, #tpu.memory_space<vmem>>, %arg3: memref<1x128xf32, #tpu.memory_space<vmem>>, %arg4: memref<128x128xbf16, #tpu.memory_space<vmem>>, %arg5: memref<1x128xf32, #tpu.memory_space<vmem>>, %arg6: memref<128x128xbf16, #tpu.memory_space<vmem>>, %arg7: memref<1x128xf32, #tpu.memory_space<vmem>>, %arg8: memref<3x128x128xf32, #tpu.memory_space<vmem>>) attributes {dimension_semantics = [], scalar_prefetch = 0 : i64, scratch_operands = 0 : i64, tpu.core_type = #tpu.core_type<tc>} {
    %c0 = arith.constant 0 : index
    %c0_0 = arith.constant 0 : index
    %0 = vector.load %arg1[%c0, %c0_0] : memref<128x128xbf16, #tpu.memory_space<vmem>>, vector<128x128xbf16>
    %c0_1 = arith.constant 0 : index
    %c0_2 = arith.constant 0 : index
    %1 = vector.load %arg0[%c0_1, %c0_2] : memref<128x128xbf16, #tpu.memory_space<vmem>>, vector<128x128xbf16>
    %c0_3 = arith.constant 0 : index
    %c0_4 = arith.constant 0 : index
    %2 = vector.load %arg2[%c0_3, %c0_4] : memref<128x128xbf16, #tpu.memory_space<vmem>>, vector<128x128xbf16>
    %c0_5 = arith.constant 0 : index
    %c0_6 = arith.constant 0 : index
    %3 = vector.load %arg3[%c0_5, %c0_6] : memref<1x128xf32, #tpu.memory_space<vmem>>, vector<1x128xf32>
    %cst = arith.constant dense<0.000000e+00> : vector<128x128xf32>
    %4 = tpu.matmul %1, %2, %cst {dimension_numbers = #tpu.dot_dimension_numbers<[1], [0], [0], [1], [0, 0, 1, 1], [], []>} : vector<128x128xbf16>, vector<128x128xbf16>, vector<128x128xf32> -> vector<128x128xf32>
    %5 = arith.truncf %4 : vector<128x128xf32> to vector<128x128xbf16>
    %cst_7 = arith.constant dense<0.000000e+00> : vector<128x128xf32>
    %6 = tpu.matmul %0, %5, %cst_7 {dimension_numbers = #tpu.dot_dimension_numbers<[1], [0], [0], [1], [0, 0, 1, 1], [], []>} : vector<128x128xbf16>, vector<128x128xbf16>, vector<128x128xf32> -> vector<128x128xf32>
    %7 = vector.broadcast %3 : vector<1x128xf32> to vector<128x128xf32>
    %8 = arith.addf %6, %7 : vector<128x128xf32>
    %cst_8 = arith.constant 0.000000e+00 : f32
    %9 = vector.broadcast %cst_8 : f32 to vector<128x128xf32>
    %10 = arith.maximumf %8, %9 : vector<128x128xf32>
    %11 = arith.truncf %10 : vector<128x128xf32> to vector<128x128xbf16>
    %c0_9 = arith.constant 0 : index
    %c0_10 = arith.constant 0 : index
    %12 = vector.load %arg4[%c0_9, %c0_10] : memref<128x128xbf16, #tpu.memory_space<vmem>>, vector<128x128xbf16>
    %c0_11 = arith.constant 0 : index
    %c0_12 = arith.constant 0 : index
    %13 = vector.load %arg5[%c0_11, %c0_12] : memref<1x128xf32, #tpu.memory_space<vmem>>, vector<1x128xf32>
    %cst_13 = arith.constant dense<0.000000e+00> : vector<128x128xf32>
    %14 = tpu.matmul %11, %12, %cst_13 {dimension_numbers = #tpu.dot_dimension_numbers<[1], [0], [0], [1], [0, 0, 1, 1], [], []>} : vector<128x128xbf16>, vector<128x128xbf16>, vector<128x128xf32> -> vector<128x128xf32>
    %15 = arith.truncf %14 : vector<128x128xf32> to vector<128x128xbf16>
    %cst_14 = arith.constant dense<0.000000e+00> : vector<128x128xf32>
    %16 = tpu.matmul %0, %15, %cst_14 {dimension_numbers = #tpu.dot_dimension_numbers<[1], [0], [0], [1], [0, 0, 1, 1], [], []>} : vector<128x128xbf16>, vector<128x128xbf16>, vector<128x128xf32> -> vector<128x128xf32>
    %17 = vector.broadcast %13 : vector<1x128xf32> to vector<128x128xf32>
    %18 = arith.addf %16, %17 : vector<128x128xf32>
    %cst_15 = arith.constant 0.000000e+00 : f32
    %19 = vector.broadcast %cst_15 : f32 to vector<128x128xf32>
    %20 = arith.maximumf %18, %19 : vector<128x128xf32>
    %c0_16 = arith.constant 0 : index
    %c0_17 = arith.constant 0 : index
    %c0_18 = arith.constant 0 : index
    %21 = vector.load %arg8[%c0_16, %c0_17, %c0_18] : memref<3x128x128xf32, #tpu.memory_space<vmem>>, vector<1x128x128xf32>
    %22 = vector.shape_cast %21 : vector<1x128x128xf32> to vector<128x128xf32>
    %23 = vector.shape_cast %20 : vector<128x128xf32> to vector<1x128x128xf32>
    tpu.vector_store %arg8[%c0_16, %c0_17, %c0_18], %23 {strides = array<i32>} : memref<3x128x128xf32, #tpu.memory_space<vmem>>, vector<1x128x128xf32>,
    %c0_19 = arith.constant 0 : index
    %c0_20 = arith.constant 0 : index
    %24 = vector.load %arg6[%c0_19, %c0_20] : memref<128x128xbf16, #tpu.memory_space<vmem>>, vector<128x128xbf16>
    %c0_21 = arith.constant 0 : index
    %c0_22 = arith.constant 0 : index
    %25 = vector.load %arg7[%c0_21, %c0_22] : memref<1x128xf32, #tpu.memory_space<vmem>>, vector<1x128xf32>
    %26 = arith.truncf %20 : vector<128x128xf32> to vector<128x128xbf16>
    %cst_23 = arith.constant dense<0.000000e+00> : vector<128x128xf32>
    %27 = tpu.matmul %26, %24, %cst_23 {dimension_numbers = #tpu.dot_dimension_numbers<[1], [0], [0], [1], [0, 0, 1, 1], [], []>} : vector<128x128xbf16>, vector<128x128xbf16>, vector<128x128xf32> -> vector<128x128xf32>
    %28 = arith.truncf %27 : vector<128x128xf32> to vector<128x128xbf16>
    %cst_24 = arith.constant dense<0.000000e+00> : vector<128x128xf32>
    %29 = tpu.matmul %0, %28, %cst_24 {dimension_numbers = #tpu.dot_dimension_numbers<[1], [0], [0], [1], [0, 0, 1, 1], [], []>} : vector<128x128xbf16>, vector<128x128xbf16>, vector<128x128xf32> -> vector<128x128xf32>
    %30 = vector.broadcast %25 : vector<1x128xf32> to vector<128x128xf32>
    %31 = arith.addf %29, %30 : vector<128x128xf32>
    %cst_25 = arith.constant 0.000000e+00 : f32
    %32 = vector.broadcast %cst_25 : f32 to vector<128x128xf32>
    %33 = arith.maximumf %31, %32 : vector<128x128xf32>
    %c1 = arith.constant 1 : index
    %c0_26 = arith.constant 0 : index
    %c0_27 = arith.constant 0 : index
    %34 = vector.load %arg8[%c1, %c0_26, %c0_27] : memref<3x128x128xf32, #tpu.memory_space<vmem>>, vector<1x128x128xf32>
    %35 = vector.shape_cast %34 : vector<1x128x128xf32> to vector<128x128xf32>
    %36 = vector.shape_cast %33 : vector<128x128xf32> to vector<1x128x128xf32>
    tpu.vector_store %arg8[%c1, %c0_26, %c0_27], %36 {strides = array<i32>} : memref<3x128x128xf32, #tpu.memory_space<vmem>>, vector<1x128x128xf32>,
    %37 = arith.truncf %33 : vector<128x128xf32> to vector<128x128xbf16>
    %cst_28 = arith.constant dense<0.000000e+00> : vector<128x128xf32>
    %38 = tpu.matmul %37, %24, %cst_28 {dimension_numbers = #tpu.dot_dimension_numbers<[1], [0], [0], [1], [0, 0, 1, 1], [], []>} : vector<128x128xbf16>, vector<128x128xbf16>, vector<128x128xf32> -> vector<128x128xf32>
    %39 = arith.truncf %38 : vector<128x128xf32> to vector<128x128xbf16>
    %cst_29 = arith.constant dense<0.000000e+00> : vector<128x128xf32>
    %40 = tpu.matmul %0, %39, %cst_29 {dimension_numbers = #tpu.dot_dimension_numbers<[1], [0], [0], [1], [0, 0, 1, 1], [], []>} : vector<128x128xbf16>, vector<128x128xbf16>, vector<128x128xf32> -> vector<128x128xf32>
    %41 = vector.broadcast %25 : vector<1x128xf32> to vector<128x128xf32>
    %42 = arith.addf %40, %41 : vector<128x128xf32>
    %cst_30 = arith.constant 0.000000e+00 : f32
    %43 = vector.broadcast %cst_30 : f32 to vector<128x128xf32>
    %44 = arith.maximumf %42, %43 : vector<128x128xf32>
    %c2 = arith.constant 2 : index
    %c0_31 = arith.constant 0 : index
    %c0_32 = arith.constant 0 : index
    %45 = vector.load %arg8[%c2, %c0_31, %c0_32] : memref<3x128x128xf32, #tpu.memory_space<vmem>>, vector<1x128x128xf32>
    %46 = vector.shape_cast %45 : vector<1x128x128xf32> to vector<128x128xf32>
    %47 = vector.shape_cast %44 : vector<128x128xf32> to vector<1x128x128xf32>
    tpu.vector_store %arg8[%c2, %c0_31, %c0_32], %47 {strides = array<i32>} : memref<3x128x128xf32, #tpu.memory_space<vmem>>, vector<1x128x128xf32>,
    return
  }
}

</mosaic_0001>

<llo_original>
// kernel: _teacher_lr_call_fused.1
$region0: #{_teacher_lr_call_fused.1}
  #allocation0 [shape = 'u32[]', space=smem, size = 0x4, offset = 0x4, fixed_abs, tag = 'smem constant byte address 0x4 - core index']
  #allocation1 [shape = 'u32[144,128]{1,0:T(1,128)}', space=vmem, size = 0x12000, scoped, tag = 'internal scratch']
  %s0 = inlined_call_operand.hbm [shape: bf16[128,128], index: 0, kind: input, shape index: {}]
  %s1 = inlined_call_operand.hbm [shape: bf16[128,128], index: 1, kind: input, shape index: {}]
  %s2 = inlined_call_operand.hbm [shape: bf16[128,128], index: 2, kind: input, shape index: {}]
  %s3 = inlined_call_operand.vmem [shape: f32[1,128], index: 3, kind: input, shape index: {}]
  %s4 = inlined_call_operand.hbm [shape: bf16[128,128], index: 4, kind: input, shape index: {}]
  %s5 = inlined_call_operand.vmem [shape: f32[1,128], index: 5, kind: input, shape index: {}]
  %s6 = inlined_call_operand.hbm [shape: bf16[128,128], index: 6, kind: input, shape index: {}]
  %s7 = inlined_call_operand.vmem [shape: f32[1,128], index: 7, kind: input, shape index: {}]
  %s8 = inlined_call_operand.hbm [shape: f32[3,128,128], index: 8, kind: output, shape index: {}]
  %s9 = sld [smem:[#allocation0]]
  $region62: #{_teacher_lr_call_fused.1} parent=0
    _
  %s11 = ssub.s32 1, %s9
  %s12 = scalar_select 0, %s11, %s9
  $region1: #{_teacher_lr_call_fused.1} parent=0
    #allocation2 [shape = 'u8[32768]{0}', space=vmem, size = 0x8000, scoped, tag = 'input window, operand 0, single buffered']
    #allocation3 [shape = 's32[1]{0}', space=sflag, size = 0x4, scoped, tag = 'scoped memory for _teacher_lr_call_fused.1']
    #allocation4 [shape = 's32[1]{0}', space=sflag, size = 0x4, scoped, tag = 'scoped memory for _teacher_lr_call_fused.1']
    #allocation5 [shape = 'u8[32768]{0}', space=vmem, size = 0x8000, scoped, tag = 'input window, operand 1, single buffered']
    #allocation6 [shape = 's32[1]{0}', space=sflag, size = 0x4, scoped, tag = 'scoped memory for _teacher_lr_call_fused.1']
    #allocation7 [shape = 'u8[32768]{0}', space=vmem, size = 0x8000, scoped, tag = 'input window, operand 2, single buffered']
    #allocation8 [shape = 'u8[32768]{0}', space=vmem, size = 0x8000, scoped, tag = 'input window, operand 4, single buffered']
    #allocation9 [shape = 's32[1]{0}', space=sflag, size = 0x4, scoped, tag = 'scoped memory for _teacher_lr_call_fused.1']
    #allocation10 [shape = 'u8[32768]{0}', space=vmem, size = 0x8000, scoped, tag = 'input window, operand 6, single buffered']
    #allocation11 [shape = 'u8[196608]{0}', space=vmem, size = 0x30000, scoped, tag = 'output window, operand 0, single buffered']
    %13 = vsyncpa [#allocation3], 0
    %14 = vsyncpa [#allocation6], 0
    %15 = vsyncpa [#allocation9], 0
    %16 = vsyncpa [#allocation4], 0
    // Predicated region
    $region2: #{_teacher_lr_call_fused.1} parent=1 // pred_check
      _
    $region3: #{_teacher_lr_call_fused.1} parent=1 // pred_check_branch
      %18 = sbr.rel (0) target = $region5
    $region4: #{_teacher_lr_call_fused.1} parent=1 // pred_region
      %s20 = ssub.s32 1024, 1024
      %21 = vsyncadd [#allocation3], %s20
      %s22 = sshll.u32 [#allocation2], 4
      %s23 = int_to_ptr.vmem [resolvable:$true] %s22
      %28 = dma.hbm_to_vmem [thread:$0]  %s0, 1024, %s23, [#allocation3], 64, 64, 4
    $region5: #{_teacher_lr_call_fused.1} parent=1 // pred_fallthru
      _
    // Predicated region
    $region6: #{_teacher_lr_call_fused.1} parent=1 // pred_check
      _
    $region7: #{_teacher_lr_call_fused.1} parent=1 // pred_check_branch
      %30 = sbr.rel (0) target = $region9
    $region8: #{_teacher_lr_call_fused.1} parent=1 // pred_region
      %s32 = ssub.s32 1024, 1024
      %33 = vsyncadd [#allocation6], %s32
      %s34 = sshll.u32 [#allocation5], 4
      %s35 = int_to_ptr.vmem [resolvable:$true] %s34
      %40 = dma.hbm_to_vmem [thread:$0]  %s1, 1024, %s35, [#allocation6], 64, 64, 4
    $region9: #{_teacher_lr_call_fused.1} parent=1 // pred_fallthru
      _
    // Predicated region
    $region10: #{_teacher_lr_call_fused.1} parent=1 // pred_check
      _
    $region11: #{_teacher_lr_call_fused.1} parent=1 // pred_check_branch
      %42 = sbr.rel (0) target = $region13
    $region12: #{_teacher_lr_call_fused.1} parent=1 // pred_region
      %s44 = ssub.s32 1024, 1024
      %45 = vsyncadd [#allocation6], %s44
      %s46 = sshll.u32 [#allocation7], 4
      %s47 = int_to_ptr.vmem [resolvable:$true] %s46
      %52 = dma.hbm_to_vmem [thread:$0]  %s2, 1024, %s47, [#allocation6], 64, 64, 4
    $region13: #{_teacher_lr_call_fused.1} parent=1 // pred_fallthru
      _
    // Predicated region
    $region14: #{_teacher_lr_call_fused.1} parent=1 // pred_check
      _
    $region15: #{_teacher_lr_call_fused.1} parent=1 // pred_check_branch
      %54 = sbr.rel (0) target = $region17
    $region16: #{_teacher_lr_call_fused.1} parent=1 // pred_region
      _
    $region17: #{_teacher_lr_call_fused.1} parent=1 // pred_fallthru
      _
    // Predicated region
    $region18: #{_teacher_lr_call_fused.1} parent=1 // pred_check
      _
    $region19: #{_teacher_lr_call_fused.1} parent=1 // pred_check_branch
      %56 = sbr.rel (0) target = $region21
    $region20: #{_teacher_lr_call_fused.1} parent=1 // pred_region
      %s58 = ssub.s32 1024, 1024
      %59 = vsyncadd [#allocation9], %s58
      %s60 = sshll.u32 [#allocation8], 4
      %s61 = int_to_ptr.vmem [resolvable:$true] %s60
      %66 = dma.hbm_to_vmem [thread:$0]  %s4, 1024, %s61, [#allocation9], 64, 64, 4
    $region21: #{_teacher_lr_call_fused.1} parent=1 // pred_fallthru
      _
    // Predicated region
    $region22: #{_teacher_lr_call_fused.1} parent=1 // pred_check
      _
    $region23: #{_teacher_lr_call_fused.1} parent=1 // pred_check_branch
      %68 = sbr.rel (0) target = $region25
    $region24: #{_teacher_lr_call_fused.1} parent=1 // pred_region
      _
    $region25: #{_teacher_lr_call_fused.1} parent=1 // pred_fallthru
      _
    // Predicated region
    $region26: #{_teacher_lr_call_fused.1} parent=1 // pred_check
      _
    $region27: #{_teacher_lr_call_fused.1} parent=1 // pred_check_branch
      %70 = sbr.rel (0) target = $region29
    $region28: #{_teacher_lr_call_fused.1} parent=1 // pred_region
      %s72 = ssub.s32 1024, 1024
      %73 = vsyncadd [#allocation9], %s72
      %s74 = sshll.u32 [#allocation10], 4
      %s75 = int_to_ptr.vmem [resolvable:$true] %s74
      %80 = dma.hbm_to_vmem [thread:$0]  %s6, 1024, %s75, [#allocation9], 64, 64, 4
    $region29: #{_teacher_lr_call_fused.1} parent=1 // pred_fallthru
      _
    // Predicated region
    $region30: #{_teacher_lr_call_fused.1} parent=1 // pred_check
      _
    $region31: #{_teacher_lr_call_fused.1} parent=1 // pred_check_branch
      %82 = sbr.rel (0) target = $region33
    $region32: #{_teacher_lr_call_fused.1} parent=1 // pred_region
      _
    $region33: #{_teacher_lr_call_fused.1} parent=1 // pred_fallthru
      _
    // Predicated region
    $region34: #{_teacher_lr_call_fused.1} parent=1 // pred_check
      _
    $region35: #{_teacher_lr_call_fused.1} parent=1 // pred_check_branch
      %84 = sbr.rel (0) target = $region37
    $region36: #{_teacher_lr_call_fused.1} parent=1 // pred_region
      %85 = dma.done [#allocation3], 1024
    $region37: #{_teacher_lr_call_fused.1} parent=1 // pred_fallthru
      _
    // Predicated region
    $region38: #{_teacher_lr_call_fused.1} parent=1 // pred_check
      _
    $region39: #{_teacher_lr_call_fused.1} parent=1 // pred_check_branch
      %87 = sbr.rel (0) target = $region41
    $region40: #{_teacher_lr_call_fused.1} parent=1 // pred_region
      %88 = dma.done [#allocation6], 1024
    $region41: #{_teacher_lr_call_fused.1} parent=1 // pred_fallthru
      _
    // Predicated region
    $region42: #{_teacher_lr_call_fused.1} parent=1 // pred_check
      _
    $region43: #{_teacher_lr_call_fused.1} parent=1 // pred_check_branch
      %90 = sbr.rel (0) target = $region45
    $region44: #{_teacher_lr_call_fused.1} parent=1 // pred_region
      %91 = dma.done [#allocation6], 1024
    $region45: #{_teacher_lr_call_fused.1} parent=1 // pred_fallthru
      _
    // Predicated region
    $region46: #{_teacher_lr_call_fused.1} parent=1 // pred_check
      _
    $region47: #{_teacher_lr_call_fused.1} parent=1 // pred_check_branch
      %93 = sbr.rel (0) target = $region49
    $region48: #{_teacher_lr_call_fused.1} parent=1 // pred_region
      %94 = dma.done [#allocation9], 1024
    $region49: #{_teacher_lr_call_fused.1} parent=1 // pred_fallthru
      _
    // Predicated region
    $region50: #{_teacher_lr_call_fused.1} parent=1 // pred_check
      _
    $region51: #{_teacher_lr_call_fused.1} parent=1 // pred_check_branch
      %96 = sbr.rel (0) target = $region53
    $region52: #{_teacher_lr_call_fused.1} parent=1 // pred_region
      %97 = dma.done [#allocation9], 1024
    $region53: #{_teacher_lr_call_fused.1} parent=1 // pred_fallthru
      _
    %v99 = vld [vmem:[#allocation5] sm:$0xf]
    %v100 = vld [vmem:[#allocation5 + $0x4] sm:$0xf]
    %v101 = vld [vmem:[#allocation5 + $0x8] sm:$0xf]
    %v102 = vld [vmem:[#allocation5 + $0xc] sm:$0xf]
    %v103 = vld [vmem:[#allocation5 + $0x10] sm:$0xf]
    %v104 = vld [vmem:[#allocation5 + $0x14] sm:$0xf]
    %v105 = vld [vmem:[#allocation5 + $0x18] sm:$0xf]
    %v106 = vld [vmem:[#allocation5 + $0x1c] sm:$0xf]
    %v107 = vld [vmem:[#allocation5 + $0x20] sm:$0xf]
    %v108 = vld [vmem:[#allocation5 + $0x24] sm:$0xf]
    %v109 = vld [vmem:[#allocation5 + $0x28] sm:$0xf]
    %v110 = vld [vmem:[#allocation5 + $0x2c] sm:$0xf]
    %v111 = vld [vmem:[#allocation5 + $0x30] sm:$0xf]
    %v112 = vld [vmem:[#allocation5 + $0x34] sm:$0xf]
    %v113 = vld [vmem:[#allocation5 + $0x38] sm:$0xf]
    %v114 = vld [vmem:[#allocation5 + $0x3c] sm:$0xf]
    %v115 = vld [vmem:[#allocation2] sm:$0xf]
    %v116 = vld [vmem:[#allocation2 + $0x4] sm:$0xf]
    %v117 = vld [vmem:[#allocation2 + $0x8] sm:$0xf]
    %v118 = vld [vmem:[#allocation2 + $0xc] sm:$0xf]
    %v119 = vld [vmem:[#allocation2 + $0x10] sm:$0xf]
    %v120 = vld [vmem:[#allocation2 + $0x14] sm:$0xf]
    %v121 = vld [vmem:[#allocation2 + $0x18] sm:$0xf]
    %v122 = vld [vmem:[#allocation2 + $0x1c] sm:$0xf]
    %v123 = vld [vmem:[#allocation2 + $0x20] sm:$0xf]
    %v124 = vld [vmem:[#allocation2 + $0x24] sm:$0xf]
    %v125 = vld [vmem:[#allocation2 + $0x28] sm:$0xf]
    %v126 = vld [vmem:[#allocation2 + $0x2c] sm:$0xf]
    %v127 = vld [vmem:[#allocation2 + $0x30] sm:$0xf]
    %v128 = vld [vmem:[#allocation2 + $0x34] sm:$0xf]
    %v129 = vld [vmem:[#allocation2 + $0x38] sm:$0xf]
    %v130 = vld [vmem:[#allocation2 + $0x3c] sm:$0xf]
    %v131 = vld [vmem:[#allocation7] sm:$0xf]
    %v132 = vld [vmem:[#allocation7 + $0x4] sm:$0xf]
    %v133 = vld [vmem:[#allocation7 + $0x8] sm:$0xf]
    %v134 = vld [vmem:[#allocation7 + $0xc] sm:$0xf]
    %v135 = vld [vmem:[#allocation7 + $0x10] sm:$0xf]
    %v136 = vld [vmem:[#allocation7 + $0x14] sm:$0xf]
    %v137 = vld [vmem:[#allocation7 + $0x18] sm:$0xf]
    %v138 = vld [vmem:[#allocation7 + $0x1c] sm:$0xf]
    %v139 = vld [vmem:[#allocation7 + $0x20] sm:$0xf]
    %v140 = vld [vmem:[#allocation7 + $0x24] sm:$0xf]
    %v141 = vld [vmem:[#allocation7 + $0x28] sm:$0xf]
    %v142 = vld [vmem:[#allocation7 + $0x2c] sm:$0xf]
    %v143 = vld [vmem:[#allocation7 + $0x30] sm:$0xf]
    %v144 = vld [vmem:[#allocation7 + $0x34] sm:$0xf]
    %v145 = vld [vmem:[#allocation7 + $0x38] sm:$0xf]
    %v146 = vld [vmem:[#allocation7 + $0x3c] sm:$0xf]
    %v147 = vld [vmem:[%s3] sm:$0x1]
    %v164 = vunpack.c.l.b16 %v115
    %v165 = vunpack.c.l.b16 %v116
    %v166 = vunpack.c.l.b16 %v117
    %v167 = vunpack.c.l.b16 %v118
    %v168 = vunpack.c.l.b16 %v119
    %v169 = vunpack.c.l.b16 %v120
    %v170 = vunpack.c.l.b16 %v121
    %v171 = vunpack.c.l.b16 %v122
    %v172 = vunpack.c.l.b16 %v123
    %v173 = vunpack.c.l.b16 %v124
    %v174 = vunpack.c.l.b16 %v125
    %v175 = vunpack.c.l.b16 %v126
    %v176 = vunpack.c.l.b16 %v127
    %v177 = vunpack.c.l.b16 %v128
    %v178 = vunpack.c.l.b16 %v129
    %v179 = vunpack.c.l.b16 %v130
    %v180 = vpack.c.b16 %v165, %v164
    %v181 = vpack.c.b16 %v167, %v166
    %v182 = vpack.c.b16 %v169, %v168
    %v183 = vpack.c.b16 %v171, %v170
    %v184 = vpack.c.b16 %v173, %v172
    %v185 = vpack.c.b16 %v175, %v174
    %v186 = vpack.c.b16 %v177, %v176
    %v187 = vpack.c.b16 %v179, %v178
    %v212 = vunpack.c.l.b16 %v131
    %v213 = vunpack.c.l.b16 %v132
    %v214 = vunpack.c.l.b16 %v133
    %v215 = vunpack.c.l.b16 %v134
    %v216 = vunpack.c.l.b16 %v135
    %v217 = vunpack.c.l.b16 %v136
    %v218 = vunpack.c.l.b16 %v137
    %v219 = vunpack.c.l.b16 %v138
    %v220 = vunpack.c.l.b16 %v139
    %v221 = vunpack.c.l.b16 %v140
    %v222 = vunpack.c.l.b16 %v141
    %v223 = vunpack.c.l.b16 %v142
    %v224 = vunpack.c.l.b16 %v143
    %v225 = vunpack.c.l.b16 %v144
    %v226 = vunpack.c.l.b16 %v145
    %v227 = vunpack.c.l.b16 %v146
    %v228 = vpack.c.b16 %v213, %v212
    %v229 = vpack.c.b16 %v215, %v214
    %v230 = vpack.c.b16 %v217, %v216
    %v231 = vpack.c.b16 %v219, %v218
    %v232 = vpack.c.b16 %v221, %v220
    %v233 = vpack.c.b16 %v223, %v222
    %v234 = vpack.c.b16 %v225, %v224
    %v235 = vpack.c.b16 %v227, %v226
    %244 = vmatprep.subr.bf16.mxu0 0
    %245 = vmatpush1.bf16.msra.mxu0 %v235
    %246 = vmatprep.subr.bf16.mxu0 0
    %247 = vmatpush1.bf16.msra.mxu0 %v234
    %248 = vmatprep.subr.bf16.mxu0 0
    %249 = vmatpush1.bf16.msra.mxu0 %v233
    %250 = vmatprep.subr.bf16.mxu0 0
    %251 = vmatpush1.bf16.msra.mxu0 %v232
    %252 = vmatprep.subr.bf16.mxu0 0
    %253 = vmatpush1.bf16.msra.mxu0 %v231
    %254 = vmatprep.subr.bf16.mxu0 0
    %255 = vmatpush1.bf16.msra.mxu0 %v230
    %256 = vmatprep.subr.bf16.mxu0 0
    %257 = vmatpush1.bf16.msra.mxu0 %v229
    %258 = vmatprep.subr.bf16.mxu0 0
    %259 = vmatpush1.bf16.msra.mxu0 %v228
    %260 = vmatprep.subr.bf16.mxu0 0
    %261 = vmatpush2.bf16.msra.mxu0 0
    %262 = vmatprep.subr.bf16.mxu0 0
    %263 = vmatpush2.bf16.msra.mxu0 0
    %264 = vmatprep.subr.bf16.mxu0 0
    %265 = vmatpush2.bf16.msra.mxu0 0
    %266 = vmatprep.subr.bf16.mxu0 0
    %267 = vmatpush2.bf16.msra.mxu0 0
    %268 = vmatprep.subr.bf16.mxu0 0
    %269 = vmatpush2.bf16.msra.mxu0 0
    %270 = vmatprep.subr.bf16.mxu0 0
    %271 = vmatpush2.bf16.msra.mxu0 0
    %272 = vmatprep.subr.bf16.mxu0 0
    %273 = vmatpush2.bf16.msra.mxu0 0
    %274 = vmatprep.subr.bf16.mxu0 0
    %275 = vmatpush2.bf16.msra.mxu0 0
    %276 = vmatprep.mubr.bf16.mxu0 0
    %277 = vmatmul.mubr.bf16.gmra.mxu0 %v180
    %v278 = vpop.f32.mrf.mxu0
    %v279 = vadd.f32 0.0, %v278
    %v280 = vpop.f32.mrf.mxu0
    %v281 = vpop.f32.mrf.mxu0
    %v282 = vadd.f32 0.0, %v281
    %v283 = vpop.f32.mrf.mxu0
    %284 = vmatprep.mubr.bf16.mxu0 0
    %285 = vmatmul.mubr.bf16.gmra.mxu0 %v181
    %v286 = vpop.f32.mrf.mxu0
    %v287 = vadd.f32 0.0, %v286
    %v288 = vpop.f32.mrf.mxu0
    %v289 = vpop.f32.mrf.mxu0
    %v290 = vadd.f32 0.0, %v289
    %v291 = vpop.f32.mrf.mxu0
    %292 = vmatprep.mubr.bf16.mxu0 0
    %293 = vmatmul.mubr.bf16.gmra.mxu0 %v182
    %v294 = vpop.f32.mrf.mxu0
    %v295 = vadd.f32 0.0, %v294
    %v296 = vpop.f32.mrf.mxu0
    %v297 = vpop.f32.mrf.mxu0
    %v298 = vadd.f32 0.0, %v297
    %v299 = vpop.f32.mrf.mxu0
    %300 = vmatprep.mubr.bf16.mxu0 0
    %301 = vmatmul.mubr.bf16.gmra.mxu0 %v183
    %v302 = vpop.f32.mrf.mxu0
    %v303 = vadd.f32 0.0, %v302
    %v304 = vpop.f32.mrf.mxu0
    %v305 = vpop.f32.mrf.mxu0
    %v306 = vadd.f32 0.0, %v305
    %v307 = vpop.f32.mrf.mxu0
    %308 = vmatprep.mubr.bf16.mxu0 0
    %309 = vmatmul.mubr.bf16.gmra.mxu0 %v184
    %v310 = vpop.f32.mrf.mxu0
    %v311 = vadd.f32 0.0, %v310
    %v312 = vpop.f32.mrf.mxu0
    %v313 = vpop.f32.mrf.mxu0
    %v314 = vadd.f32 0.0, %v313
    %v315 = vpop.f32.mrf.mxu0
    %316 = vmatprep.mubr.bf16.mxu0 0
    %317 = vmatmul.mubr.bf16.gmra.mxu0 %v185
    %v318 = vpop.f32.mrf.mxu0
    %v319 = vadd.f32 0.0, %v318
    %v320 = vpop.f32.mrf.mxu0
    %v321 = vpop.f32.mrf.mxu0
    %v322 = vadd.f32 0.0, %v321
    %v323 = vpop.f32.mrf.mxu0
    %324 = vmatprep.mubr.bf16.mxu0 0
    %325 = vmatmul.mubr.bf16.gmra.mxu0 %v186
    %v326 = vpop.f32.mrf.mxu0
    %v327 = vadd.f32 0.0, %v326
    %v328 = vpop.f32.mrf.mxu0
    %v329 = vpop.f32.mrf.mxu0
    %v330 = vadd.f32 0.0, %v329
    %v331 = vpop.f32.mrf.mxu0
    %332 = vmatprep.mubr.bf16.mxu0 0
    %333 = vmatmul.mubr.bf16.gmra.mxu0 %v187
    %v334 = vpop.f32.mrf.mxu0
    %v335 = vadd.f32 0.0, %v334
    %v336 = vpop.f32.mrf.mxu0
    %v337 = vpop.f32.mrf.mxu0
    %v338 = vadd.f32 0.0, %v337
    %v339 = vpop.f32.mrf.mxu0
    %340 = vdwg.mxu0
    %v341 = vpack.c.bf16 %v282, %v279
    %v342 = vpack.c.bf16 %v290, %v287
    %v343 = vpack.c.bf16 %v298, %v295
    %v344 = vpack.c.bf16 %v306, %v303
    %v345 = vpack.c.bf16 %v314, %v311
    %v346 = vpack.c.bf16 %v322, %v319
    %v347 = vpack.c.bf16 %v330, %v327
    %v348 = vpack.c.bf16 %v338, %v335
    %v350 = vlaneseq
    %v351 = vshrl.u32 %v350, 7
    %v352 = vsub.s32 0, %v351
    %v353 = vrot.slane %v147, %v352
    %v371 = vunpack.c.l.b16 %v99
    %v372 = vunpack.c.l.b16 %v100
    %v373 = vunpack.c.l.b16 %v101
    %v374 = vunpack.c.l.b16 %v102
    %v375 = vunpack.c.l.b16 %v103
    %v376 = vunpack.c.l.b16 %v104
    %v377 = vunpack.c.l.b16 %v105
    %v378 = vunpack.c.l.b16 %v106
    %v379 = vunpack.c.l.b16 %v107
    %v380 = vunpack.c.l.b16 %v108
    %v381 = vunpack.c.l.b16 %v109
    %v382 = vunpack.c.l.b16 %v110
    %v383 = vunpack.c.l.b16 %v111
    %v384 = vunpack.c.l.b16 %v112
    %v385 = vunpack.c.l.b16 %v113
    %v386 = vunpack.c.l.b16 %v114
    %v387 = vpack.c.b16 %v372, %v371
    %v388 = vpack.c.b16 %v374, %v373
    %v389 = vpack.c.b16 %v376, %v375
    %v390 = vpack.c.b16 %v378, %v377
    %v391 = vpack.c.b16 %v380, %v379
    %v392 = vpack.c.b16 %v382, %v381
    %v393 = vpack.c.b16 %v384, %v383
    %v394 = vpack.c.b16 %v386, %v385
    %403 = vmatprep.subr.bf16.mxu0 0
    %404 = vmatpush1.bf16.msra.mxu0 %v348
    %405 = vmatprep.subr.bf16.mxu0 0
    %406 = vmatpush1.bf16.msra.mxu0 %v347
    %407 = vmatprep.subr.bf16.mxu0 0
    %408 = vmatpush1.bf16.msra.mxu0 %v346
    %409 = vmatprep.subr.bf16.mxu0 0
    %410 = vmatpush1.bf16.msra.mxu0 %v345
    %411 = vmatprep.subr.bf16.mxu0 0
    %412 = vmatpush1.bf16.msra.mxu0 %v344
    %413 = vmatprep.subr.bf16.mxu0 0
    %414 = vmatpush1.bf16.msra.mxu0 %v343
    %415 = vmatprep.subr.bf16.mxu0 0
    %416 = vmatpush1.bf16.msra.mxu0 %v342
    %417 = vmatprep.subr.bf16.mxu0 0
    %418 = vmatpush1.bf16.msra.mxu0 %v341
    %419 = vmatprep.subr.bf16.mxu0 0
    %420 = vmatpush2.bf16.msra.mxu0 0
    %421 = vmatprep.subr.bf16.mxu0 0
    %422 = vmatpush2.bf16.msra.mxu0 0
    %423 = vmatprep.subr.bf16.mxu0 0
    %424 = vmatpush2.bf16.msra.mxu0 0
    %425 = vmatprep.subr.bf16.mxu0 0
    %426 = vmatpush2.bf16.msra.mxu0 0
    %427 = vmatprep.subr.bf16.mxu0 0
    %428 = vmatpush2.bf16.msra.mxu0 0
    %429 = vmatprep.subr.bf16.mxu0 0
    %430 = vmatpush2.bf16.msra.mxu0 0
    %431 = vmatprep.subr.bf16.mxu0 0
    %432 = vmatpush2.bf16.msra.mxu0 0
    %433 = vmatprep.subr.bf16.mxu0 0
    %434 = vmatpush2.bf16.msra.mxu0 0
    %435 = vmatprep.mubr.bf16.mxu0 0
    %436 = vmatmul.mubr.bf16.gmra.mxu0 %v387
    %v437 = vpop.f32.mrf.mxu0
    %v438 = vadd.f32 %v353, %v437
    %v439 = vpop.f32.mrf.mxu0
    %v440 = vpop.f32.mrf.mxu0
    %v441 = vadd.f32 %v353, %v440
    %v442 = vpop.f32.mrf.mxu0
    %443 = vmatprep.mubr.bf16.mxu0 0
    %444 = vmatmul.mubr.bf16.gmra.mxu0 %v388
    %v445 = vpop.f32.mrf.mxu0
    %v446 = vadd.f32 %v353, %v445
    %v447 = vpop.f32.mrf.mxu0
    %v448 = vpop.f32.mrf.mxu0
    %v449 = vadd.f32 %v353, %v448
    %v450 = vpop.f32.mrf.mxu0
    %451 = vmatprep.mubr.bf16.mxu0 0
    %452 = vmatmul.mubr.bf16.gmra.mxu0 %v389
    %v453 = vpop.f32.mrf.mxu0
    %v454 = vadd.f32 %v353, %v453
    %v455 = vpop.f32.mrf.mxu0
    %v456 = vpop.f32.mrf.mxu0
    %v457 = vadd.f32 %v353, %v456
    %v458 = vpop.f32.mrf.mxu0
    %459 = vmatprep.mubr.bf16.mxu0 0
    %460 = vmatmul.mubr.bf16.gmra.mxu0 %v390
    %v461 = vpop.f32.mrf.mxu0
    %v462 = vadd.f32 %v353, %v461
    %v463 = vpop.f32.mrf.mxu0
    %v464 = vpop.f32.mrf.mxu0
    %v465 = vadd.f32 %v353, %v464
    %v466 = vpop.f32.mrf.mxu0
    %467 = vmatprep.mubr.bf16.mxu0 0
    %468 = vmatmul.mubr.bf16.gmra.mxu0 %v391
    %v469 = vpop.f32.mrf.mxu0
    %v470 = vadd.f32 %v353, %v469
    %v471 = vpop.f32.mrf.mxu0
    %v472 = vpop.f32.mrf.mxu0
    %v473 = vadd.f32 %v353, %v472
    %v474 = vpop.f32.mrf.mxu0
    %475 = vmatprep.mubr.bf16.mxu0 0
    %476 = vmatmul.mubr.bf16.gmra.mxu0 %v392
    %v477 = vpop.f32.mrf.mxu0
    %v478 = vadd.f32 %v353, %v477
    %v479 = vpop.f32.mrf.mxu0
    %v480 = vpop.f32.mrf.mxu0
    %v481 = vadd.f32 %v353, %v480
    %v482 = vpop.f32.mrf.mxu0
    %483 = vmatprep.mubr.bf16.mxu0 0
    %484 = vmatmul.mubr.bf16.gmra.mxu0 %v393
    %v485 = vpop.f32.mrf.mxu0
    %v486 = vadd.f32 %v353, %v485
    %v487 = vpop.f32.mrf.mxu0
    %v488 = vpop.f32.mrf.mxu0
    %v489 = vadd.f32 %v353, %v488
    %v490 = vpop.f32.mrf.mxu0
    %491 = vmatprep.mubr.bf16.mxu0 0
    %492 = vmatmul.mubr.bf16.gmra.mxu0 %v394
    %v493 = vpop.f32.mrf.mxu0
    %v494 = vadd.f32 %v353, %v493
    %v495 = vpop.f32.mrf.mxu0
    %v496 = vpop.f32.mrf.mxu0
    %v497 = vadd.f32 %v353, %v496
    %v498 = vpop.f32.mrf.mxu0
    %499 = vdwg.mxu0
    %v500 = vmax.f32 %v438, 0.0
    %v501 = vmax.f32 %v441, 0.0
    %v502 = vmax.f32 %v446, 0.0
    %v503 = vmax.f32 %v449, 0.0
    %v504 = vmax.f32 %v454, 0.0
    %v505 = vmax.f32 %v457, 0.0
    %v506 = vmax.f32 %v462, 0.0
    %v507 = vmax.f32 %v465, 0.0
    %v508 = vmax.f32 %v470, 0.0
    %v509 = vmax.f32 %v473, 0.0
    %v510 = vmax.f32 %v478, 0.0
    %v511 = vmax.f32 %v481, 0.0
    %v512 = vmax.f32 %v486, 0.0
    %v513 = vmax.f32 %v489, 0.0
    %v514 = vmax.f32 %v494, 0.0
    %v515 = vmax.f32 %v497, 0.0
    %v516 = vpack.c.bf16 %v501, %v500
    %v517 = vpack.c.bf16 %v503, %v502
    %v518 = vpack.c.bf16 %v505, %v504
    %v519 = vpack.c.bf16 %v507, %v506
    %v520 = vpack.c.bf16 %v509, %v508
    %v521 = vpack.c.bf16 %v511, %v510
    %v522 = vpack.c.bf16 %v513, %v512
    %v523 = vpack.c.bf16 %v515, %v514
    %v524 = vld [vmem:[#allocation8] sm:$0xf]
    %v525 = vld [vmem:[#allocation8 + $0x4] sm:$0xf]
    %v526 = vld [vmem:[#allocation8 + $0x8] sm:$0xf]
    %v527 = vld [vmem:[#allocation8 + $0xc] sm:$0xf]
    %v528 = vld [vmem:[#allocation8 + $0x10] sm:$0xf]
    %v529 = vld [vmem:[#allocation8 + $0x14] sm:$0xf]
    %v530 = vld [vmem:[#allocation8 + $0x18] sm:$0xf]
    %v531 = vld [vmem:[#allocation8 + $0x1c] sm:$0xf]
    %v532 = vld [vmem:[#allocation8 + $0x20] sm:$0xf]
    %v533 = vld [vmem:[#allocation8 + $0x24] sm:$0xf]
    %v534 = vld [vmem:[#allocation8 + $0x28] sm:$0xf]
    %v535 = vld [vmem:[#allocation8 + $0x2c] sm:$0xf]
    %v536 = vld [vmem:[#allocation8 + $0x30] sm:$0xf]
    %v537 = vld [vmem:[#allocation8 + $0x34] sm:$0xf]
    %v538 = vld [vmem:[#allocation8 + $0x38] sm:$0xf]
    %v539 = vld [vmem:[#allocation8 + $0x3c] sm:$0xf]
    %v540 = vld [vmem:[%s5] sm:$0x1]
    %v557 = vunpack.c.l.b16 %v524
    %v558 = vunpack.c.l.b16 %v525
    %v559 = vunpack.c.l.b16 %v526
    %v560 = vunpack.c.l.b16 %v527
    %v561 = vunpack.c.l.b16 %v528
    %v562 = vunpack.c.l.b16 %v529
    %v563 = vunpack.c.l.b16 %v530
    %v564 = vunpack.c.l.b16 %v531
    %v565 = vunpack.c.l.b16 %v532
    %v566 = vunpack.c.l.b16 %v533
    %v567 = vunpack.c.l.b16 %v534
    %v568 = vunpack.c.l.b16 %v535
    %v569 = vunpack.c.l.b16 %v536
    %v570 = vunpack.c.l.b16 %v537
    %v571 = vunpack.c.l.b16 %v538
    %v572 = vunpack.c.l.b16 %v539
    %v573 = vpack.c.b16 %v558, %v557
    %v574 = vpack.c.b16 %v560, %v559
    %v575 = vpack.c.b16 %v562, %v561
    %v576 = vpack.c.b16 %v564, %v563
    %v577 = vpack.c.b16 %v566, %v565
    %v578 = vpack.c.b16 %v568, %v567
    %v579 = vpack.c.b16 %v570, %v569
    %v580 = vpack.c.b16 %v572, %v571
    %589 = vmatprep.subr.bf16.mxu0 0
    %590 = vmatpush1.bf16.msra.mxu0 %v580
    %591 = vmatprep.subr.bf16.mxu0 0
    %592 = vmatpush1.bf16.msra.mxu0 %v579
    %593 = vmatprep.subr.bf16.mxu0 0
    %594 = vmatpush1.bf16.msra.mxu0 %v578
    %595 = vmatprep.subr.bf16.mxu0 0
    %596 = vmatpush1.bf16.msra.mxu0 %v577
    %597 = vmatprep.subr.bf16.mxu0 0
    %598 = vmatpush1.bf16.msra.mxu0 %v576
    %599 = vmatprep.subr.bf16.mxu0 0
    %600 = vmatpush1.bf16.msra.mxu0 %v575
    %601 = vmatprep.subr.bf16.mxu0 0
    %602 = vmatpush1.bf16.msra.mxu0 %v574
    %603 = vmatprep.subr.bf16.mxu0 0
    %604 = vmatpush1.bf16.msra.mxu0 %v573
    %605 = vmatprep.subr.bf16.mxu0 0
    %606 = vmatpush2.bf16.msra.mxu0 0
    %607 = vmatprep.subr.bf16.mxu0 0
    %608 = vmatpush2.bf16.msra.mxu0 0
    %609 = vmatprep.subr.bf16.mxu0 0
    %610 = vmatpush2.bf16.msra.mxu0 0
    %611 = vmatprep.subr.bf16.mxu0 0
    %612 = vmatpush2.bf16.msra.mxu0 0
    %613 = vmatprep.subr.bf16.mxu0 0
    %614 = vmatpush2.bf16.msra.mxu0 0
    %615 = vmatprep.subr.bf16.mxu0 0
    %616 = vmatpush2.bf16.msra.mxu0 0
    %617 = vmatprep.subr.bf16.mxu0 0
    %618 = vmatpush2.bf16.msra.mxu0 0
    %619 = vmatprep.subr.bf16.mxu0 0
    %620 = vmatpush2.bf16.msra.mxu0 0
    %621 = vmatprep.mubr.bf16.mxu0 0
    %622 = vmatmul.mubr.bf16.gmra.mxu0 %v516
    %v623 = vpop.f32.mrf.mxu0
    %v624 = vadd.f32 0.0, %v623
    %v625 = vpop.f32.mrf.mxu0
    %v626 = vpop.f32.mrf.mxu0
    %v627 = vadd.f32 0.0, %v626
    %v628 = vpop.f32.mrf.mxu0
    %629 = vmatprep.mubr.bf16.mxu0 0
    %630 = vmatmul.mubr.bf16.gmra.mxu0 %v517
    %v631 = vpop.f32.mrf.mxu0
    %v632 = vadd.f32 0.0, %v631
    %v633 = vpop.f32.mrf.mxu0
    %v634 = vpop.f32.mrf.mxu0
    %v635 = vadd.f32 0.0, %v634
    %v636 = vpop.f32.mrf.mxu0
    %637 = vmatprep.mubr.bf16.mxu0 0
    %638 = vmatmul.mubr.bf16.gmra.mxu0 %v518
    %v639 = vpop.f32.mrf.mxu0
    %v640 = vadd.f32 0.0, %v639
    %v641 = vpop.f32.mrf.mxu0
    %v642 = vpop.f32.mrf.mxu0
    %v643 = vadd.f32 0.0, %v642
    %v644 = vpop.f32.mrf.mxu0
    %645 = vmatprep.mubr.bf16.mxu0 0
    %646 = vmatmul.mubr.bf16.gmra.mxu0 %v519
    %v647 = vpop.f32.mrf.mxu0
    %v648 = vadd.f32 0.0, %v647
    %v649 = vpop.f32.mrf.mxu0
    %v650 = vpop.f32.mrf.mxu0
    %v651 = vadd.f32 0.0, %v650
    %v652 = vpop.f32.mrf.mxu0
    %653 = vmatprep.mubr.bf16.mxu0 0
    %654 = vmatmul.mubr.bf16.gmra.mxu0 %v520
    %v655 = vpop.f32.mrf.mxu0
    %v656 = vadd.f32 0.0, %v655
    %v657 = vpop.f32.mrf.mxu0
    %v658 = vpop.f32.mrf.mxu0
    %v659 = vadd.f32 0.0, %v658
    %v660 = vpop.f32.mrf.mxu0
    %661 = vmatprep.mubr.bf16.mxu0 0
    %662 = vmatmul.mubr.bf16.gmra.mxu0 %v521
    %v663 = vpop.f32.mrf.mxu0
    %v664 = vadd.f32 0.0, %v663
    %v665 = vpop.f32.mrf.mxu0
    %v666 = vpop.f32.mrf.mxu0
    %v667 = vadd.f32 0.0, %v666
    %v668 = vpop.f32.mrf.mxu0
    %669 = vmatprep.mubr.bf16.mxu0 0
    %670 = vmatmul.mubr.bf16.gmra.mxu0 %v522
    %v671 = vpop.f32.mrf.mxu0
    %v672 = vadd.f32 0.0, %v671
    %v673 = vpop.f32.mrf.mxu0
    %v674 = vpop.f32.mrf.mxu0
    %v675 = vadd.f32 0.0, %v674
    %v676 = vpop.f32.mrf.mxu0
    %677 = vmatprep.mubr.bf16.mxu0 0
    %678 = vmatmul.mubr.bf16.gmra.mxu0 %v523
    %v679 = vpop.f32.mrf.mxu0
    %v680 = vadd.f32 0.0, %v679
    %v681 = vpop.f32.mrf.mxu0
    %v682 = vpop.f32.mrf.mxu0
    %v683 = vadd.f32 0.0, %v682
    %v684 = vpop.f32.mrf.mxu0
    %685 = vdwg.mxu0
    %v686 = vpack.c.bf16 %v627, %v624
    %v687 = vpack.c.bf16 %v635, %v632
    %v688 = vpack.c.bf16 %v643, %v640
    %v689 = vpack.c.bf16 %v651, %v648
    %v690 = vpack.c.bf16 %v659, %v656
    %v691 = vpack.c.bf16 %v667, %v664
    %v692 = vpack.c.bf16 %v675, %v672
    %v693 = vpack.c.bf16 %v683, %v680
    %v695 = vlaneseq
    %v696 = vshrl.u32 %v695, 7
    %v697 = vsub.s32 0, %v696
    %v698 = vrot.slane %v540, %v697
    %700 = vmatprep.subr.bf16.mxu0 0
    %701 = vmatpush1.bf16.msra.mxu0 %v693
    %702 = vmatprep.subr.bf16.mxu0 0
    %703 = vmatpush1.bf16.msra.mxu0 %v692
    %704 = vmatprep.subr.bf16.mxu0 0
    %705 = vmatpush1.bf16.msra.mxu0 %v691
    %706 = vmatprep.subr.bf16.mxu0 0
    %707 = vmatpush1.bf16.msra.mxu0 %v690
    %708 = vmatprep.subr.bf16.mxu0 0
    %709 = vmatpush1.bf16.msra.mxu0 %v689
    %710 = vmatprep.subr.bf16.mxu0 0
    %711 = vmatpush1.bf16.msra.mxu0 %v688
    %712 = vmatprep.subr.bf16.mxu0 0
    %713 = vmatpush1.bf16.msra.mxu0 %v687
    %714 = vmatprep.subr.bf16.mxu0 0
    %715 = vmatpush1.bf16.msra.mxu0 %v686
    %716 = vmatprep.subr.bf16.mxu0 0
    %717 = vmatpush2.bf16.msra.mxu0 0
    %718 = vmatprep.subr.bf16.mxu0 0
    %719 = vmatpush2.bf16.msra.mxu0 0
    %720 = vmatprep.subr.bf16.mxu0 0
    %721 = vmatpush2.bf16.msra.mxu0 0
    %722 = vmatprep.subr.bf16.mxu0 0
    %723 = vmatpush2.bf16.msra.mxu0 0
    %724 = vmatprep.subr.bf16.mxu0 0
    %725 = vmatpush2.bf16.msra.mxu0 0
    %726 = vmatprep.subr.bf16.mxu0 0
    %727 = vmatpush2.bf16.msra.mxu0 0
    %728 = vmatprep.subr.bf16.mxu0 0
    %729 = vmatpush2.bf16.msra.mxu0 0
    %730 = vmatprep.subr.bf16.mxu0 0
    %731 = vmatpush2.bf16.msra.mxu0 0
    %732 = vmatprep.mubr.bf16.mxu0 0
    %733 = vmatmul.mubr.bf16.gmra.mxu0 %v387
    %v734 = vpop.f32.mrf.mxu0
    %v735 = vadd.f32 %v698, %v734
    %v736 = vpop.f32.mrf.mxu0
    %v737 = vpop.f32.mrf.mxu0
    %v738 = vadd.f32 %v698, %v737
    %v739 = vpop.f32.mrf.mxu0
    %740 = vmatprep.mubr.bf16.mxu0 0
    %741 = vmatmul.mubr.bf16.gmra.mxu0 %v388
    %v742 = vpop.f32.mrf.mxu0
    %v743 = vadd.f32 %v698, %v742
    %v744 = vpop.f32.mrf.mxu0
    %v745 = vpop.f32.mrf.mxu0
    %v746 = vadd.f32 %v698, %v745
    %v747 = vpop.f32.mrf.mxu0
    %748 = vmatprep.mubr.bf16.mxu0 0
    %749 = vmatmul.mubr.bf16.gmra.mxu0 %v389
    %v750 = vpop.f32.mrf.mxu0
    %v751 = vadd.f32 %v698, %v750
    %v752 = vpop.f32.mrf.mxu0
    %v753 = vpop.f32.mrf.mxu0
    %v754 = vadd.f32 %v698, %v753
    %v755 = vpop.f32.mrf.mxu0
    %756 = vmatprep.mubr.bf16.mxu0 0
    %757 = vmatmul.mubr.bf16.gmra.mxu0 %v390
    %v758 = vpop.f32.mrf.mxu0
    %v759 = vadd.f32 %v698, %v758
    %v760 = vpop.f32.mrf.mxu0
    %v761 = vpop.f32.mrf.mxu0
    %v762 = vadd.f32 %v698, %v761
    %v763 = vpop.f32.mrf.mxu0
    %764 = vmatprep.mubr.bf16.mxu0 0
    %765 = vmatmul.mubr.bf16.gmra.mxu0 %v391
    %v766 = vpop.f32.mrf.mxu0
    %v767 = vadd.f32 %v698, %v766
    %v768 = vpop.f32.mrf.mxu0
    %v769 = vpop.f32.mrf.mxu0
    %v770 = vadd.f32 %v698, %v769
    %v771 = vpop.f32.mrf.mxu0
    %772 = vmatprep.mubr.bf16.mxu0 0
    %773 = vmatmul.mubr.bf16.gmra.mxu0 %v392
    %v774 = vpop.f32.mrf.mxu0
    %v775 = vadd.f32 %v698, %v774
    %v776 = vpop.f32.mrf.mxu0
    %v777 = vpop.f32.mrf.mxu0
    %v778 = vadd.f32 %v698, %v777
    %v779 = vpop.f32.mrf.mxu0
    %780 = vmatprep.mubr.bf16.mxu0 0
    %781 = vmatmul.mubr.bf16.gmra.mxu0 %v393
    %v782 = vpop.f32.mrf.mxu0
    %v783 = vadd.f32 %v698, %v782
    %v784 = vpop.f32.mrf.mxu0
    %v785 = vpop.f32.mrf.mxu0
    %v786 = vadd.f32 %v698, %v785
    %v787 = vpop.f32.mrf.mxu0
    %788 = vmatprep.mubr.bf16.mxu0 0
    %789 = vmatmul.mubr.bf16.gmra.mxu0 %v394
    %v790 = vpop.f32.mrf.mxu0
    %v791 = vadd.f32 %v698, %v790
    %v792 = vpop.f32.mrf.mxu0
    %v793 = vpop.f32.mrf.mxu0
    %v794 = vadd.f32 %v698, %v793
    %v795 = vpop.f32.mrf.mxu0
    %796 = vdwg.mxu0
    %v797 = vmax.f32 %v735, 0.0
    %v798 = vmax.f32 %v738, 0.0
    %v799 = vmax.f32 %v743, 0.0
    %v800 = vmax.f32 %v746, 0.0
    %v801 = vmax.f32 %v751, 0.0
    %v802 = vmax.f32 %v754, 0.0
    %v803 = vmax.f32 %v759, 0.0
    %v804 = vmax.f32 %v762, 0.0
    %v805 = vmax.f32 %v767, 0.0
    %v806 = vmax.f32 %v770, 0.0
    %v807 = vmax.f32 %v775, 0.0
    %v808 = vmax.f32 %v778, 0.0
    %v809 = vmax.f32 %v783, 0.0
    %v810 = vmax.f32 %v786, 0.0
    %v811 = vmax.f32 %v791, 0.0
    %v812 = vmax.f32 %v794, 0.0
    %813 = vst [vmem:[#allocation11] sm:$0xff] %v797
    %814 = vst [vmem:[#allocation11 + $0x8] sm:$0xff] %v798
    %815 = vst [vmem:[#allocation11 + $0x10] sm:$0xff] %v799
    %816 = vst [vmem:[#allocation11 + $0x18] sm:$0xff] %v800
    %817 = vst [vmem:[#allocation11 + $0x20] sm:$0xff] %v801
    %818 = vst [vmem:[#allocation11 + $0x28] sm:$0xff] %v802
    %819 = vst [vmem:[#allocation11 + $0x30] sm:$0xff] %v803
    %820 = vst [vmem:[#allocation11 + $0x38] sm:$0xff] %v804
    %821 = vst [vmem:[#allocation11 + $0x40] sm:$0xff] %v805
    %822 = vst [vmem:[#allocation11 + $0x48] sm:$0xff] %v806
    %823 = vst [vmem:[#allocation11 + $0x50] sm:$0xff] %v807
    %824 = vst [vmem:[#allocation11 + $0x58] sm:$0xff] %v808
    %825 = vst [vmem:[#allocation11 + $0x60] sm:$0xff] %v809
    %826 = vst [vmem:[#allocation11 + $0x68] sm:$0xff] %v810
    %827 = vst [vmem:[#allocation11 + $0x70] sm:$0xff] %v811
    %828 = vst [vmem:[#allocation11 + $0x78] sm:$0xff] %v812
    %v829 = vld [vmem:[#allocation10] sm:$0xf]
    %v830 = vld [vmem:[#allocation10 + $0x4] sm:$0xf]
    %v831 = vld [vmem:[#allocation10 + $0x8] sm:$0xf]
    %v832 = vld [vmem:[#allocation10 + $0xc] sm:$0xf]
    %v833 = vld [vmem:[#allocation10 + $0x10] sm:$0xf]
    %v834 = vld [vmem:[#allocation10 + $0x14] sm:$0xf]
    %v835 = vld [vmem:[#allocation10 + $0x18] sm:$0xf]
    %v836 = vld [vmem:[#allocation10 + $0x1c] sm:$0xf]
    %v837 = vld [vmem:[#allocation10 + $0x20] sm:$0xf]
    %v838 = vld [vmem:[#allocation10 + $0x24] sm:$0xf]
    %v839 = vld [vmem:[#allocation10 + $0x28] sm:$0xf]
    %v840 = vld [vmem:[#allocation10 + $0x2c] sm:$0xf]
    %v841 = vld [vmem:[#allocation10 + $0x30] sm:$0xf]
    %v842 = vld [vmem:[#allocation10 + $0x34] sm:$0xf]
    %v843 = vld [vmem:[#allocation10 + $0x38] sm:$0xf]
    %v844 = vld [vmem:[#allocation10 + $0x3c] sm:$0xf]
    %v845 = vld [vmem:[%s7] sm:$0x1]
    %v846 = vpack.c.bf16 %v798, %v797
    %v847 = vpack.c.bf16 %v800, %v799
    %v848 = vpack.c.bf16 %v802, %v801
    %v849 = vpack.c.bf16 %v804, %v803
    %v850 = vpack.c.bf16 %v806, %v805
    %v851 = vpack.c.bf16 %v808, %v807
    %v852 = vpack.c.bf16 %v810, %v809
    %v853 = vpack.c.bf16 %v812, %v811
    %v870 = vunpack.c.l.b16 %v829
    %v871 = vunpack.c.l.b16 %v830
    %v872 = vunpack.c.l.b16 %v831
    %v873 = vunpack.c.l.b16 %v832
    %v874 = vunpack.c.l.b16 %v833
    %v875 = vunpack.c.l.b16 %v834
    %v876 = vunpack.c.l.b16 %v835
    %v877 = vunpack.c.l.b16 %v836
    %v878 = vunpack.c.l.b16 %v837
    %v879 = vunpack.c.l.b16 %v838
    %v880 = vunpack.c.l.b16 %v839
    %v881 = vunpack.c.l.b16 %v840
    %v882 = vunpack.c.l.b16 %v841
    %v883 = vunpack.c.l.b16 %v842
    %v884 = vunpack.c.l.b16 %v843
    %v885 = vunpack.c.l.b16 %v844
    %v886 = vpack.c.b16 %v871, %v870
    %v887 = vpack.c.b16 %v873, %v872
    %v888 = vpack.c.b16 %v875, %v874
    %v889 = vpack.c.b16 %v877, %v876
    %v890 = vpack.c.b16 %v879, %v878
    %v891 = vpack.c.b16 %v881, %v880
    %v892 = vpack.c.b16 %v883, %v882
    %v893 = vpack.c.b16 %v885, %v884
    %902 = vmatprep.subr.bf16.mxu0 0
    %903 = vmatpush1.bf16.msra.mxu0 %v893
    %904 = vmatprep.subr.bf16.mxu0 0
    %905 = vmatpush1.bf16.msra.mxu0 %v892
    %906 = vmatprep.subr.bf16.mxu0 0
    %907 = vmatpush1.bf16.msra.mxu0 %v891
    %908 = vmatprep.subr.bf16.mxu0 0
    %909 = vmatpush1.bf16.msra.mxu0 %v890
    %910 = vmatprep.subr.bf16.mxu0 0
    %911 = vmatpush1.bf16.msra.mxu0 %v889
    %912 = vmatprep.subr.bf16.mxu0 0
    %913 = vmatpush1.bf16.msra.mxu0 %v888
    %914 = vmatprep.subr.bf16.mxu0 0
    %915 = vmatpush1.bf16.msra.mxu0 %v887
    %916 = vmatprep.subr.bf16.mxu0 0
    %917 = vmatpush1.bf16.msra.mxu0 %v886
    %918 = vmatprep.subr.bf16.mxu0 0
    %919 = vmatpush2.bf16.msra.mxu0 0
    %920 = vmatprep.subr.bf16.mxu0 0
    %921 = vmatpush2.bf16.msra.mxu0 0
    %922 = vmatprep.subr.bf16.mxu0 0
    %923 = vmatpush2.bf16.msra.mxu0 0
    %924 = vmatprep.subr.bf16.mxu0 0
    %925 = vmatpush2.bf16.msra.mxu0 0
    %926 = vmatprep.subr.bf16.mxu0 0
    %927 = vmatpush2.bf16.msra.mxu0 0
    %928 = vmatprep.subr.bf16.mxu0 0
    %929 = vmatpush2.bf16.msra.mxu0 0
    %930 = vmatprep.subr.bf16.mxu0 0
    %931 = vmatpush2.bf16.msra.mxu0 0
    %932 = vmatprep.subr.bf16.mxu0 0
    %933 = vmatpush2.bf16.msra.mxu0 0
    %934 = vmatprep.mubr.bf16.mxu0 0
    %935 = vmatmul.mubr.bf16.gmra.mxu0 %v846
    %v936 = vpop.f32.mrf.mxu0
    %v937 = vadd.f32 0.0, %v936
    %v938 = vpop.f32.mrf.mxu0
    %v939 = vpop.f32.mrf.mxu0
    %v940 = vadd.f32 0.0, %v939
    %v941 = vpop.f32.mrf.mxu0
    %942 = vmatprep.mubr.bf16.mxu0 0
    %943 = vmatmul.mubr.bf16.gmra.mxu0 %v847
    %v944 = vpop.f32.mrf.mxu0
    %v945 = vadd.f32 0.0, %v944
    %v946 = vpop.f32.mrf.mxu0
    %v947 = vpop.f32.mrf.mxu0
    %v948 = vadd.f32 0.0, %v947
    %v949 = vpop.f32.mrf.mxu0
    %950 = vmatprep.mubr.bf16.mxu0 0
    %951 = vmatmul.mubr.bf16.gmra.mxu0 %v848
    %v952 = vpop.f32.mrf.mxu0
    %v953 = vadd.f32 0.0, %v952
    %v954 = vpop.f32.mrf.mxu0
    %v955 = vpop.f32.mrf.mxu0
    %v956 = vadd.f32 0.0, %v955
    %v957 = vpop.f32.mrf.mxu0
    %958 = vmatprep.mubr.bf16.mxu0 0
    %959 = vmatmul.mubr.bf16.gmra.mxu0 %v849
    %v960 = vpop.f32.mrf.mxu0
    %v961 = vadd.f32 0.0, %v960
    %v962 = vpop.f32.mrf.mxu0
    %v963 = vpop.f32.mrf.mxu0
    %v964 = vadd.f32 0.0, %v963
    %v965 = vpop.f32.mrf.mxu0
    %966 = vmatprep.mubr.bf16.mxu0 0
    %967 = vmatmul.mubr.bf16.gmra.mxu0 %v850
    %v968 = vpop.f32.mrf.mxu0
    %v969 = vadd.f32 0.0, %v968
    %v970 = vpop.f32.mrf.mxu0
    %v971 = vpop.f32.mrf.mxu0
    %v972 = vadd.f32 0.0, %v971
    %v973 = vpop.f32.mrf.mxu0
    %974 = vmatprep.mubr.bf16.mxu0 0
    %975 = vmatmul.mubr.bf16.gmra.mxu0 %v851
    %v976 = vpop.f32.mrf.mxu0
    %v977 = vadd.f32 0.0, %v976
    %v978 = vpop.f32.mrf.mxu0
    %v979 = vpop.f32.mrf.mxu0
    %v980 = vadd.f32 0.0, %v979
    %v981 = vpop.f32.mrf.mxu0
    %982 = vmatprep.mubr.bf16.mxu0 0
    %983 = vmatmul.mubr.bf16.gmra.mxu0 %v852
    %v984 = vpop.f32.mrf.mxu0
    %v985 = vadd.f32 0.0, %v984
    %v986 = vpop.f32.mrf.mxu0
    %v987 = vpop.f32.mrf.mxu0
    %v988 = vadd.f32 0.0, %v987
    %v989 = vpop.f32.mrf.mxu0
    %990 = vmatprep.mubr.bf16.mxu0 0
    %991 = vmatmul.mubr.bf16.gmra.mxu0 %v853
    %v992 = vpop.f32.mrf.mxu0
    %v993 = vadd.f32 0.0, %v992
    %v994 = vpop.f32.mrf.mxu0
    %v995 = vpop.f32.mrf.mxu0
    %v996 = vadd.f32 0.0, %v995
    %v997 = vpop.f32.mrf.mxu0
    %998 = vdwg.mxu0
    %v999 = vpack.c.bf16 %v940, %v937
    %v1000 = vpack.c.bf16 %v948, %v945
    %v1001 = vpack.c.bf16 %v956, %v953
    %v1002 = vpack.c.bf16 %v964, %v961
    %v1003 = vpack.c.bf16 %v972, %v969
    %v1004 = vpack.c.bf16 %v980, %v977
    %v1005 = vpack.c.bf16 %v988, %v985
    %v1006 = vpack.c.bf16 %v996, %v993
    %v1008 = vlaneseq
    %v1009 = vshrl.u32 %v1008, 7
    %v1010 = vsub.s32 0, %v1009
    %v1011 = vrot.slane %v845, %v1010
    %1013 = vmatprep.subr.bf16.mxu0 0
    %1014 = vmatpush1.bf16.msra.mxu0 %v1006
    %1015 = vmatprep.subr.bf16.mxu0 0
    %1016 = vmatpush1.bf16.msra.mxu0 %v1005
    %1017 = vmatprep.subr.bf16.mxu0 0
    %1018 = vmatpush1.bf16.msra.mxu0 %v1004
    %1019 = vmatprep.subr.bf16.mxu0 0
    %1020 = vmatpush1.bf16.msra.mxu0 %v1003
    %1021 = vmatprep.subr.bf16.mxu0 0
    %1022 = vmatpush1.bf16.msra.mxu0 %v1002
    %1023 = vmatprep.subr.bf16.mxu0 0
    %1024 = vmatpush1.bf16.msra.mxu0 %v1001
    %1025 = vmatprep.subr.bf16.mxu0 0
    %1026 = vmatpush1.bf16.msra.mxu0 %v1000
    %1027 = vmatprep.subr.bf16.mxu0 0
    %1028 = vmatpush1.bf16.msra.mxu0 %v999
    %1029 = vmatprep.subr.bf16.mxu0 0
    %1030 = vmatpush2.bf16.msra.mxu0 0
    %1031 = vmatprep.subr.bf16.mxu0 0
    %1032 = vmatpush2.bf16.msra.mxu0 0
    %1033 = vmatprep.subr.bf16.mxu0 0
    %1034 = vmatpush2.bf16.msra.mxu0 0
    %1035 = vmatprep.subr.bf16.mxu0 0
    %1036 = vmatpush2.bf16.msra.mxu0 0
    %1037 = vmatprep.subr.bf16.mxu0 0
    %1038 = vmatpush2.bf16.msra.mxu0 0
    %1039 = vmatprep.subr.bf16.mxu0 0
    %1040 = vmatpush2.bf16.msra.mxu0 0
    %1041 = vmatprep.subr.bf16.mxu0 0
    %1042 = vmatpush2.bf16.msra.mxu0 0
    %1043 = vmatprep.subr.bf16.mxu0 0
    %1044 = vmatpush2.bf16.msra.mxu0 0
    %1045 = vmatprep.mubr.bf16.mxu0 0
    %1046 = vmatmul.mubr.bf16.gmra.mxu0 %v387
    %v1047 = vpop.f32.mrf.mxu0
    %v1048 = vadd.f32 %v1011, %v1047
    %v1049 = vpop.f32.mrf.mxu0
    %v1050 = vpop.f32.mrf.mxu0
    %v1051 = vadd.f32 %v1011, %v1050
    %v1052 = vpop.f32.mrf.mxu0
    %1053 = vmatprep.mubr.bf16.mxu0 0
    %1054 = vmatmul.mubr.bf16.gmra.mxu0 %v388
    %v1055 = vpop.f32.mrf.mxu0
    %v1056 = vadd.f32 %v1011, %v1055
    %v1057 = vpop.f32.mrf.mxu0
    %v1058 = vpop.f32.mrf.mxu0
    %v1059 = vadd.f32 %v1011, %v1058
    %v1060 = vpop.f32.mrf.mxu0
    %1061 = vmatprep.mubr.bf16.mxu0 0
    %1062 = vmatmul.mubr.bf16.gmra.mxu0 %v389
    %v1063 = vpop.f32.mrf.mxu0
    %v1064 = vadd.f32 %v1011, %v1063
    %v1065 = vpop.f32.mrf.mxu0
    %v1066 = vpop.f32.mrf.mxu0
    %v1067 = vadd.f32 %v1011, %v1066
    %v1068 = vpop.f32.mrf.mxu0
    %1069 = vmatprep.mubr.bf16.mxu0 0
    %1070 = vmatmul.mubr.bf16.gmra.mxu0 %v390
    %v1071 = vpop.f32.mrf.mxu0
    %v1072 = vadd.f32 %v1011, %v1071
    %v1073 = vpop.f32.mrf.mxu0
    %v1074 = vpop.f32.mrf.mxu0
    %v1075 = vadd.f32 %v1011, %v1074
    %v1076 = vpop.f32.mrf.mxu0
    %1077 = vmatprep.mubr.bf16.mxu0 0
    %1078 = vmatmul.mubr.bf16.gmra.mxu0 %v391
    %v1079 = vpop.f32.mrf.mxu0
    %v1080 = vadd.f32 %v1011, %v1079
    %v1081 = vpop.f32.mrf.mxu0
    %v1082 = vpop.f32.mrf.mxu0
    %v1083 = vadd.f32 %v1011, %v1082
    %v1084 = vpop.f32.mrf.mxu0
    %1085 = vmatprep.mubr.bf16.mxu0 0
    %1086 = vmatmul.mubr.bf16.gmra.mxu0 %v392
    %v1087 = vpop.f32.mrf.mxu0
    %v1088 = vadd.f32 %v1011, %v1087
    %v1089 = vpop.f32.mrf.mxu0
    %v1090 = vpop.f32.mrf.mxu0
    %v1091 = vadd.f32 %v1011, %v1090
    %v1092 = vpop.f32.mrf.mxu0
    %1093 = vmatprep.mubr.bf16.mxu0 0
    %1094 = vmatmul.mubr.bf16.gmra.mxu0 %v393
    %v1095 = vpop.f32.mrf.mxu0
    %v1096 = vadd.f32 %v1011, %v1095
    %v1097 = vpop.f32.mrf.mxu0
    %v1098 = vpop.f32.mrf.mxu0
    %v1099 = vadd.f32 %v1011, %v1098
    %v1100 = vpop.f32.mrf.mxu0
    %1101 = vmatprep.mubr.bf16.mxu0 0
    %1102 = vmatmul.mubr.bf16.gmra.mxu0 %v394
    %v1103 = vpop.f32.mrf.mxu0
    %v1104 = vadd.f32 %v1011, %v1103
    %v1105 = vpop.f32.mrf.mxu0
    %v1106 = vpop.f32.mrf.mxu0
    %v1107 = vadd.f32 %v1011, %v1106
    %v1108 = vpop.f32.mrf.mxu0
    %1109 = vdwg.mxu0
    %v1110 = vmax.f32 %v1048, 0.0
    %v1111 = vmax.f32 %v1051, 0.0
    %v1112 = vmax.f32 %v1056, 0.0
    %v1113 = vmax.f32 %v1059, 0.0
    %v1114 = vmax.f32 %v1064, 0.0
    %v1115 = vmax.f32 %v1067, 0.0
    %v1116 = vmax.f32 %v1072, 0.0
    %v1117 = vmax.f32 %v1075, 0.0
    %v1118 = vmax.f32 %v1080, 0.0
    %v1119 = vmax.f32 %v1083, 0.0
    %v1120 = vmax.f32 %v1088, 0.0
    %v1121 = vmax.f32 %v1091, 0.0
    %v1122 = vmax.f32 %v1096, 0.0
    %v1123 = vmax.f32 %v1099, 0.0
    %v1124 = vmax.f32 %v1104, 0.0
    %v1125 = vmax.f32 %v1107, 0.0
    %s1126 = scalar_lea.vmem [#allocation11], 128
    %1127 = vst [vmem:[%s1126] sm:$0xff] %v1110
    %1128 = vst [vmem:[%s1126 + $0x8] sm:$0xff] %v1111
    %1129 = vst [vmem:[%s1126 + $0x10] sm:$0xff] %v1112
    %1130 = vst [vmem:[%s1126 + $0x18] sm:$0xff] %v1113
    %1131 = vst [vmem:[%s1126 + $0x20] sm:$0xff] %v1114
    %1132 = vst [vmem:[%s1126 + $0x28] sm:$0xff] %v1115
    %1133 = vst [vmem:[%s1126 + $0x30] sm:$0xff] %v1116
    %1134 = vst [vmem:[%s1126 + $0x38] sm:$0xff] %v1117
    %1135 = vst [vmem:[%s1126 + $0x40] sm:$0xff] %v1118
    %1136 = vst [vmem:[%s1126 + $0x48] sm:$0xff] %v1119
    %1137 = vst [vmem:[%s1126 + $0x50] sm:$0xff] %v1120
    %1138 = vst [vmem:[%s1126 + $0x58] sm:$0xff] %v1121
    %1139 = vst [vmem:[%s1126 + $0x60] sm:$0xff] %v1122
    %1140 = vst [vmem:[%s1126 + $0x68] sm:$0xff] %v1123
    %1141 = vst [vmem:[%s1126 + $0x70] sm:$0xff] %v1124
    %1142 = vst [vmem:[%s1126 + $0x78] sm:$0xff] %v1125
    %v1143 = vpack.c.bf16 %v1111, %v1110
    %v1144 = vpack.c.bf16 %v1113, %v1112
    %v1145 = vpack.c.bf16 %v1115, %v1114
    %v1146 = vpack.c.bf16 %v1117, %v1116
    %v1147 = vpack.c.bf16 %v1119, %v1118
    %v1148 = vpack.c.bf16 %v1121, %v1120
    %v1149 = vpack.c.bf16 %v1123, %v1122
    %v1150 = vpack.c.bf16 %v1125, %v1124
    %1151 = vmatprep.subr.bf16.mxu0 0
    %1152 = vmatpush1.bf16.msra.mxu0 %v893
    %1153 = vmatprep.subr.bf16.mxu0 0
    %1154 = vmatpush1.bf16.msra.mxu0 %v892
    %1155 = vmatprep.subr.bf16.mxu0 0
    %1156 = vmatpush1.bf16.msra.mxu0 %v891
    %1157 = vmatprep.subr.bf16.mxu0 0
    %1158 = vmatpush1.bf16.msra.mxu0 %v890
    %1159 = vmatprep.subr.bf16.mxu0 0
    %1160 = vmatpush1.bf16.msra.mxu0 %v889
    %1161 = vmatprep.subr.bf16.mxu0 0
    %1162 = vmatpush1.bf16.msra.mxu0 %v888
    %1163 = vmatprep.subr.bf16.mxu0 0
    %1164 = vmatpush1.bf16.msra.mxu0 %v887
    %1165 = vmatprep.subr.bf16.mxu0 0
    %1166 = vmatpush1.bf16.msra.mxu0 %v886
    %1167 = vmatprep.subr.bf16.mxu0 0
    %1168 = vmatpush2.bf16.msra.mxu0 0
    %1169 = vmatprep.subr.bf16.mxu0 0
    %1170 = vmatpush2.bf16.msra.mxu0 0
    %1171 = vmatprep.subr.bf16.mxu0 0
    %1172 = vmatpush2.bf16.msra.mxu0 0
    %1173 = vmatprep.subr.bf16.mxu0 0
    %1174 = vmatpush2.bf16.msra.mxu0 0
    %1175 = vmatprep.subr.bf16.mxu0 0
    %1176 = vmatpush2.bf16.msra.mxu0 0
    %1177 = vmatprep.subr.bf16.mxu0 0
    %1178 = vmatpush2.bf16.msra.mxu0 0
    %1179 = vmatprep.subr.bf16.mxu0 0
    %1180 = vmatpush2.bf16.msra.mxu0 0
    %1181 = vmatprep.subr.bf16.mxu0 0
    %1182 = vmatpush2.bf16.msra.mxu0 0
    %1183 = vmatprep.mubr.bf16.mxu0 0
    %1184 = vmatmul.mubr.bf16.gmra.mxu0 %v1143
    %v1185 = vpop.f32.mrf.mxu0
    %v1186 = vadd.f32 0.0, %v1185
    %v1187 = vpop.f32.mrf.mxu0
    %v1188 = vpop.f32.mrf.mxu0
    %v1189 = vadd.f32 0.0, %v1188
    %v1190 = vpop.f32.mrf.mxu0
    %1191 = vmatprep.mubr.bf16.mxu0 0
    %1192 = vmatmul.mubr.bf16.gmra.mxu0 %v1144
    %v1193 = vpop.f32.mrf.mxu0
    %v1194 = vadd.f32 0.0, %v1193
    %v1195 = vpop.f32.mrf.mxu0
    %v1196 = vpop.f32.mrf.mxu0
    %v1197 = vadd.f32 0.0, %v1196
    %v1198 = vpop.f32.mrf.mxu0
    %1199 = vmatprep.mubr.bf16.mxu0 0
    %1200 = vmatmul.mubr.bf16.gmra.mxu0 %v1145
    %v1201 = vpop.f32.mrf.mxu0
    %v1202 = vadd.f32 0.0, %v1201
    %v1203 = vpop.f32.mrf.mxu0
    %v1204 = vpop.f32.mrf.mxu0
    %v1205 = vadd.f32 0.0, %v1204
    %v1206 = vpop.f32.mrf.mxu0
    %1207 = vmatprep.mubr.bf16.mxu0 0
    %1208 = vmatmul.mubr.bf16.gmra.mxu0 %v1146
    %v1209 = vpop.f32.mrf.mxu0
    %v1210 = vadd.f32 0.0, %v1209
    %v1211 = vpop.f32.mrf.mxu0
    %v1212 = vpop.f32.mrf.mxu0
    %v1213 = vadd.f32 0.0, %v1212
    %v1214 = vpop.f32.mrf.mxu0
    %1215 = vmatprep.mubr.bf16.mxu0 0
    %1216 = vmatmul.mubr.bf16.gmra.mxu0 %v1147
    %v1217 = vpop.f32.mrf.mxu0
    %v1218 = vadd.f32 0.0, %v1217
    %v1219 = vpop.f32.mrf.mxu0
    %v1220 = vpop.f32.mrf.mxu0
    %v1221 = vadd.f32 0.0, %v1220
    %v1222 = vpop.f32.mrf.mxu0
    %1223 = vmatprep.mubr.bf16.mxu0 0
    %1224 = vmatmul.mubr.bf16.gmra.mxu0 %v1148
    %v1225 = vpop.f32.mrf.mxu0
    %v1226 = vadd.f32 0.0, %v1225
    %v1227 = vpop.f32.mrf.mxu0
    %v1228 = vpop.f32.mrf.mxu0
    %v1229 = vadd.f32 0.0, %v1228
    %v1230 = vpop.f32.mrf.mxu0
    %1231 = vmatprep.mubr.bf16.mxu0 0
    %1232 = vmatmul.mubr.bf16.gmra.mxu0 %v1149
    %v1233 = vpop.f32.mrf.mxu0
    %v1234 = vadd.f32 0.0, %v1233
    %v1235 = vpop.f32.mrf.mxu0
    %v1236 = vpop.f32.mrf.mxu0
    %v1237 = vadd.f32 0.0, %v1236
    %v1238 = vpop.f32.mrf.mxu0
    %1239 = vmatprep.mubr.bf16.mxu0 0
    %1240 = vmatmul.mubr.bf16.gmra.mxu0 %v1150
    %v1241 = vpop.f32.mrf.mxu0
    %v1242 = vadd.f32 0.0, %v1241
    %v1243 = vpop.f32.mrf.mxu0
    %v1244 = vpop.f32.mrf.mxu0
    %v1245 = vadd.f32 0.0, %v1244
    %v1246 = vpop.f32.mrf.mxu0
    %1247 = vdwg.mxu0
    %v1248 = vpack.c.bf16 %v1189, %v1186
    %v1249 = vpack.c.bf16 %v1197, %v1194
    %v1250 = vpack.c.bf16 %v1205, %v1202
    %v1251 = vpack.c.bf16 %v1213, %v1210
    %v1252 = vpack.c.bf16 %v1221, %v1218
    %v1253 = vpack.c.bf16 %v1229, %v1226
    %v1254 = vpack.c.bf16 %v1237, %v1234
    %v1255 = vpack.c.bf16 %v1245, %v1242
    %1256 = vmatprep.subr.bf16.mxu0 0
    %1257 = vmatpush1.bf16.msra.mxu0 %v1255
    %1258 = vmatprep.subr.bf16.mxu0 0
    %1259 = vmatpush1.bf16.msra.mxu0 %v1254
    %1260 = vmatprep.subr.bf16.mxu0 0
    %1261 = vmatpush1.bf16.msra.mxu0 %v1253
    %1262 = vmatprep.subr.bf16.mxu0 0
    %1263 = vmatpush1.bf16.msra.mxu0 %v1252
    %1264 = vmatprep.subr.bf16.mxu0 0
    %1265 = vmatpush1.bf16.msra.mxu0 %v1251
    %1266 = vmatprep.subr.bf16.mxu0 0
    %1267 = vmatpush1.bf16.msra.mxu0 %v1250
    %1268 = vmatprep.subr.bf16.mxu0 0
    %1269 = vmatpush1.bf16.msra.mxu0 %v1249
    %1270 = vmatprep.subr.bf16.mxu0 0
    %1271 = vmatpush1.bf16.msra.mxu0 %v1248
    %1272 = vmatprep.subr.bf16.mxu0 0
    %1273 = vmatpush2.bf16.msra.mxu0 0
    %1274 = vmatprep.subr.bf16.mxu0 0
    %1275 = vmatpush2.bf16.msra.mxu0 0
    %1276 = vmatprep.subr.bf16.mxu0 0
    %1277 = vmatpush2.bf16.msra.mxu0 0
    %1278 = vmatprep.subr.bf16.mxu0 0
    %1279 = vmatpush2.bf16.msra.mxu0 0
    %1280 = vmatprep.subr.bf16.mxu0 0
    %1281 = vmatpush2.bf16.msra.mxu0 0
    %1282 = vmatprep.subr.bf16.mxu0 0
    %1283 = vmatpush2.bf16.msra.mxu0 0
    %1284 = vmatprep.subr.bf16.mxu0 0
    %1285 = vmatpush2.bf16.msra.mxu0 0
    %1286 = vmatprep.subr.bf16.mxu0 0
    %1287 = vmatpush2.bf16.msra.mxu0 0
    %1288 = vmatprep.mubr.bf16.mxu0 0
    %1289 = vmatmul.mubr.bf16.gmra.mxu0 %v387
    %v1290 = vpop.f32.mrf.mxu0
    %v1291 = vadd.f32 %v1011, %v1290
    %v1292 = vpop.f32.mrf.mxu0
    %v1293 = vpop.f32.mrf.mxu0
    %v1294 = vadd.f32 %v1011, %v1293
    %v1295 = vpop.f32.mrf.mxu0
    %1296 = vmatprep.mubr.bf16.mxu0 0
    %1297 = vmatmul.mubr.bf16.gmra.mxu0 %v388
    %v1298 = vpop.f32.mrf.mxu0
    %v1299 = vadd.f32 %v1011, %v1298
    %v1300 = vpop.f32.mrf.mxu0
    %v1301 = vpop.f32.mrf.mxu0
    %v1302 = vadd.f32 %v1011, %v1301
    %v1303 = vpop.f32.mrf.mxu0
    %1304 = vmatprep.mubr.bf16.mxu0 0
    %1305 = vmatmul.mubr.bf16.gmra.mxu0 %v389
    %v1306 = vpop.f32.mrf.mxu0
    %v1307 = vadd.f32 %v1011, %v1306
    %v1308 = vpop.f32.mrf.mxu0
    %v1309 = vpop.f32.mrf.mxu0
    %v1310 = vadd.f32 %v1011, %v1309
    %v1311 = vpop.f32.mrf.mxu0
    %1312 = vmatprep.mubr.bf16.mxu0 0
    %1313 = vmatmul.mubr.bf16.gmra.mxu0 %v390
    %v1314 = vpop.f32.mrf.mxu0
    %v1315 = vadd.f32 %v1011, %v1314
    %v1316 = vpop.f32.mrf.mxu0
    %v1317 = vpop.f32.mrf.mxu0
    %v1318 = vadd.f32 %v1011, %v1317
    %v1319 = vpop.f32.mrf.mxu0
    %1320 = vmatprep.mubr.bf16.mxu0 0
    %1321 = vmatmul.mubr.bf16.gmra.mxu0 %v391
    %v1322 = vpop.f32.mrf.mxu0
    %v1323 = vadd.f32 %v1011, %v1322
    %v1324 = vpop.f32.mrf.mxu0
    %v1325 = vpop.f32.mrf.mxu0
    %v1326 = vadd.f32 %v1011, %v1325
    %v1327 = vpop.f32.mrf.mxu0
    %1328 = vmatprep.mubr.bf16.mxu0 0
    %1329 = vmatmul.mubr.bf16.gmra.mxu0 %v392
    %v1330 = vpop.f32.mrf.mxu0
    %v1331 = vadd.f32 %v1011, %v1330
    %v1332 = vpop.f32.mrf.mxu0
    %v1333 = vpop.f32.mrf.mxu0
    %v1334 = vadd.f32 %v1011, %v1333
    %v1335 = vpop.f32.mrf.mxu0
    %1336 = vmatprep.mubr.bf16.mxu0 0
    %1337 = vmatmul.mubr.bf16.gmra.mxu0 %v393
    %v1338 = vpop.f32.mrf.mxu0
    %v1339 = vadd.f32 %v1011, %v1338
    %v1340 = vpop.f32.mrf.mxu0
    %v1341 = vpop.f32.mrf.mxu0
    %v1342 = vadd.f32 %v1011, %v1341
    %v1343 = vpop.f32.mrf.mxu0
    %1344 = vmatprep.mubr.bf16.mxu0 0
    %1345 = vmatmul.mubr.bf16.gmra.mxu0 %v394
    %v1346 = vpop.f32.mrf.mxu0
    %v1347 = vadd.f32 %v1011, %v1346
    %v1348 = vpop.f32.mrf.mxu0
    %v1349 = vpop.f32.mrf.mxu0
    %v1350 = vadd.f32 %v1011, %v1349
    %v1351 = vpop.f32.mrf.mxu0
    %1352 = vdwg.mxu0
    %v1353 = vmax.f32 %v1291, 0.0
    %v1354 = vmax.f32 %v1294, 0.0
    %v1355 = vmax.f32 %v1299, 0.0
    %v1356 = vmax.f32 %v1302, 0.0
    %v1357 = vmax.f32 %v1307, 0.0
    %v1358 = vmax.f32 %v1310, 0.0
    %v1359 = vmax.f32 %v1315, 0.0
    %v1360 = vmax.f32 %v1318, 0.0
    %v1361 = vmax.f32 %v1323, 0.0
    %v1362 = vmax.f32 %v1326, 0.0
    %v1363 = vmax.f32 %v1331, 0.0
    %v1364 = vmax.f32 %v1334, 0.0
    %v1365 = vmax.f32 %v1339, 0.0
    %v1366 = vmax.f32 %v1342, 0.0
    %v1367 = vmax.f32 %v1347, 0.0
    %v1368 = vmax.f32 %v1350, 0.0
    %s1369 = scalar_lea.vmem [#allocation11], 256
    %1370 = vst [vmem:[%s1369] sm:$0xff] %v1353
    %1371 = vst [vmem:[%s1369 + $0x8] sm:$0xff] %v1354
    %1372 = vst [vmem:[%s1369 + $0x10] sm:$0xff] %v1355
    %1373 = vst [vmem:[%s1369 + $0x18] sm:$0xff] %v1356
    %1374 = vst [vmem:[%s1369 + $0x20] sm:$0xff] %v1357
    %1375 = vst [vmem:[%s1369 + $0x28] sm:$0xff] %v1358
    %1376 = vst [vmem:[%s1369 + $0x30] sm:$0xff] %v1359
    %1377 = vst [vmem:[%s1369 + $0x38] sm:$0xff] %v1360
    %1378 = vst [vmem:[%s1369 + $0x40] sm:$0xff] %v1361
    %1379 = vst [vmem:[%s1369 + $0x48] sm:$0xff] %v1362
    %1380 = vst [vmem:[%s1369 + $0x50] sm:$0xff] %v1363
    %1381 = vst [vmem:[%s1369 + $0x58] sm:$0xff] %v1364
    %1382 = vst [vmem:[%s1369 + $0x60] sm:$0xff] %v1365
    %1383 = vst [vmem:[%s1369 + $0x68] sm:$0xff] %v1366
    %1384 = vst [vmem:[%s1369 + $0x70] sm:$0xff] %v1367
    %1385 = vst [vmem:[%s1369 + $0x78] sm:$0xff] %v1368
    // Predicated region
    $region54: #{_teacher_lr_call_fused.1} parent=1 // pred_check
      _
    $region55: #{_teacher_lr_call_fused.1} parent=1 // pred_check_branch
      %1387 = sbr.rel (0) target = $region57
    $region56: #{_teacher_lr_call_fused.1} parent=1 // pred_region
      %s1389 = ssub.s32 6144, 6144
      %1390 = vsyncadd [#allocation4], %s1389
      %s1391 = sshll.u32 [#allocation11], 4
      %s1392 = int_to_ptr.vmem [resolvable:$true] %s1391
      %1397 = dma.vmem_to_hbm [thread:$0]  %s1392, 6144, %s8, [#allocation4], 128, 128, 8
    $region57: #{_teacher_lr_call_fused.1} parent=1 // pred_fallthru
      _
    // Predicated region
    $region58: #{_teacher_lr_call_fused.1} parent=1 // pred_check
      _
    $region59: #{_teacher_lr_call_fused.1} parent=1 // pred_check_branch
      %1399 = sbr.rel (0) target = $region61
    $region60: #{_teacher_lr_call_fused.1} parent=1 // pred_region
      %1400 = dma.done [#allocation4], 6144
    $region61: #{_teacher_lr_call_fused.1} parent=1 // pred_fallthru
      _
    %1401 = vsyncpa [#allocation3], 1
    %1402 = vsyncpa [#allocation6], 1
    %1403 = vsyncpa [#allocation9], 1
    %1404 = vsyncpa [#allocation4], 1

</llo_original>
